<compile_context>
chip_gen: v7x
topology: tpu7x:2x2x1
jax: 0.10.0
libtpu: 0.0.40
codegen_flags: <defaults>
</compile_context>

<pallas_src>
import functools

import jax
import jax.numpy as jnp
from jax.experimental import pallas as pl
from jax.experimental.pallas import tpu as pltpu


def _encoder_kernel(*refs, T, B, H, num_layers):
    """Fused multi-layer LSTM forward.

    Ref layout (positional):
      refs[0]                      : x2d      (T*B, D)         time-major, flattened
      refs[1 + 3*l .. 3 + 3*l]     : W_ih^T (Din, 4H), W_hh^T (H, 4H), bias (1, 4H)
      refs[1 + 3*L], refs[2 + 3*L] : hidden (L, B, H), cell (L, B, H)   [outputs]
      refs[3 + 3*L], refs[4 + 3*L] : gate_sc (T*B, 4H), hseq_sc (T*B, H) [scratch]
    """
    x_ref = refs[0]
    w_refs = refs[1:1 + 3 * num_layers]
    hid_ref = refs[1 + 3 * num_layers]
    cell_ref = refs[2 + 3 * num_layers]
    gate_sc = refs[3 + 3 * num_layers]
    hseq_sc = refs[4 + 3 * num_layers]

    # Static lane mask selecting the "g" gate lanes [2H, 3H) (tanh) vs the
    # i/f/o lanes (sigmoid).  PyTorch gate order: i, f, g, o.
    lane = jax.lax.broadcasted_iota(jnp.int32, (1, 4 * H), 1)
    is_g_lane = (lane >= 2 * H) & (lane < 3 * H)

    zeros = jnp.zeros((B, H), jnp.float32)

    for layer in range(num_layers):
        wih_ref = w_refs[3 * layer + 0]
        whh_ref = w_refs[3 * layer + 1]
        b_ref = w_refs[3 * layer + 2]

        layer_in = x_ref if layer == 0 else hseq_sc

        # --- Prologue: hoisted input projection for all T time steps. ---
        # (T*B, Din) @ (Din, 4H) + (1, 4H)  -> one MXU matmul per layer.
        gate_sc[...] = (
            jnp.dot(layer_in[...], wih_ref[...],
                    preferred_element_type=jnp.float32)
            + b_ref[...]
        )

        whh = whh_ref[...]                       # (H, 4H), resident in vregs
        is_last_layer = (layer == num_layers - 1)

        def body(t, carry, _whh=whh, _last=is_last_layer):
            h_prev, c_prev = carry
            # gates_t = (x_t @ W_ih^T + b) + h_{t-1} @ W_hh^T
            gates = (gate_sc[pl.ds(t * B, B), :]
                     + jnp.dot(h_prev, _whh,
                               preferred_element_type=jnp.float32))
            # One sigmoid + one tanh over the full (B, 4H) slab, then select
            # the tanh result on the g-gate lanes with a static mask.
            sig = jax.nn.sigmoid(gates)
            th = jnp.tanh(gates)
            act = jnp.where(is_g_lane, th, sig)

            i_g = act[:, 0 * H:1 * H]
            f_g = act[:, 1 * H:2 * H]
            g_g = act[:, 2 * H:3 * H]
            o_g = act[:, 3 * H:4 * H]

            c_new = f_g * c_prev + i_g * g_g
            h_new = o_g * jnp.tanh(c_new)

            if not _last:
                # Stash layer output in VMEM scratch -> next layer's input.
                hseq_sc[pl.ds(t * B, B), :] = h_new
            return h_new, c_new

        h_fin, c_fin = jax.lax.fori_loop(0, T, body, (zeros, zeros),
                                         unroll=True)

        # Final-state writeback (the module only returns (h_n, c_n)).
        hid_ref[layer] = h_fin
        cell_ref[layer] = c_fin


@jax.jit
def encoder_forward(x, params):
    """x: (B, T, input_dim) batch-first.  Returns (hidden, cell): (L, B, H)."""
    B, T, D = x.shape
    L = len(params)
    H = params[0][1].shape[1]                    # w_hh: (4H, H)

    # Time-major, flattened to 2D so the hoisted projection is a single
    # lane/sublane-friendly (T*B, D) @ (D, 4H) matmul; row index = t*B + b.
    x2d = jnp.transpose(x, (1, 0, 2)).reshape(T * B, D)

    args = [x2d]
    for (w_ih, w_hh, b_ih, b_hh) in params:
        args.append(jnp.asarray(w_ih.T, jnp.float32))                  # (Din, 4H)
        args.append(jnp.asarray(w_hh.T, jnp.float32))                  # (H, 4H)
        args.append(jnp.asarray((b_ih + b_hh).reshape(1, 4 * H),
                                jnp.float32))                          # (1, 4H)

    kernel = functools.partial(_encoder_kernel, T=T, B=B, H=H, num_layers=L)

    vmem = pl.BlockSpec(memory_space=pltpu.MemorySpace.VMEM)
    hidden, cell = pl.pallas_call(
        kernel,
        out_shape=(
            jax.ShapeDtypeStruct((L, B, H), jnp.float32),   # h_n
            jax.ShapeDtypeStruct((L, B, H), jnp.float32),   # c_n
        ),
        in_specs=[vmem] * len(args),
        out_specs=(vmem, vmem),
        scratch_shapes=[
            pltpu.VMEM((T * B, 4 * H), jnp.float32),   # per-layer gate slab
            pltpu.VMEM((T * B, H), jnp.float32),       # inter-layer h_seq
        ],
    )(*args)
    return hidden, cell


class EncoderPallas:
    """Pallas equivalent of the PyTorch Encoder (multi-layer LSTM, batch_first).

    Eval-mode forward only (inter-layer dropout = identity)."""

    def __init__(self, input_dim, hidden_dim, num_layers, key):
        self.input_dim = input_dim
        self.hidden_dim = hidden_dim
        self.num_layers = num_layers
        self.params = []
        k = 1.0 / jnp.sqrt(jnp.float32(hidden_dim))
        for layer in range(num_layers):
            in_dim = input_dim if layer == 0 else hidden_dim
            key, k1, k2, k3, k4 = jax.random.split(key, 5)
            w_ih = jax.random.uniform(k1, (4 * hidden_dim, in_dim),
                                      jnp.float32, -k, k)
            w_hh = jax.random.uniform(k2, (4 * hidden_dim, hidden_dim),
                                      jnp.float32, -k, k)
            b_ih = jax.random.uniform(k3, (4 * hidden_dim,), jnp.float32, -k, k)
            b_hh = jax.random.uniform(k4, (4 * hidden_dim,), jnp.float32, -k, k)
            self.params.append((w_ih, w_hh, b_ih, b_hh))

    def __call__(self, x):
        # x: (B, T, input_dim), matching nn.LSTM(batch_first=True)
        return encoder_forward(x, tuple(self.params))


def _reference_lstm(x, params, hidden_dim):
    """Pure-JAX reference (same math as PyTorch nn.LSTM, eval mode)."""
    B, T, _ = x.shape
    layer_in = jnp.transpose(x, (1, 0, 2))
    h_finals, c_finals = [], []
    for (w_ih, w_hh, b_ih, b_hh) in params:
        h = jnp.zeros((B, hidden_dim), jnp.float32)
        c = jnp.zeros((B, hidden_dim), jnp.float32)
        outs = []
        for t in range(layer_in.shape[0]):
            gates = layer_in[t] @ w_ih.T + h @ w_hh.T + b_ih + b_hh
            i_g, f_g, g_g, o_g = jnp.split(gates, 4, axis=-1)
            i_g = jax.nn.sigmoid(i_g)
            f_g = jax.nn.sigmoid(f_g)
            g_g = jnp.tanh(g_g)
            o_g = jax.nn.sigmoid(o_g)
            c = f_g * c + i_g * g_g
            h = o_g * jnp.tanh(c)
            outs.append(h)
        layer_in = jnp.stack(outs, axis=0)
        h_finals.append(h)
        c_finals.append(c)
    return jnp.stack(h_finals, 0), jnp.stack(c_finals, 0)


if __name__ == "__main__":
    # Small shapes consistent with the module: batch=4 sequences, seq_length=8,
    # input_dim=16 (PCA dim), hidden_dim=32, num_layers=2.
    B, T, D, H, L = 4, 8, 16, 32, 2

    key = jax.random.PRNGKey(0)
    key, xkey, pkey = jax.random.split(key, 3)
    x = jax.random.normal(xkey, (B, T, D), dtype=jnp.float32)

    enc = EncoderPallas(input_dim=D, hidden_dim=H, num_layers=L, key=pkey)

    hidden, cell = enc(x)
    hidden = jax.block_until_ready(hidden)
    cell = jax.block_until_ready(cell)

    # Sanity check against pure-JAX reference.
    h_ref, c_ref = _reference_lstm(x, enc.params, H)
    assert hidden.shape == (L, B, H) and cell.shape == (L, B, H)
    assert jnp.allclose(hidden, h_ref, atol=1e-5, rtol=1e-5)
    assert jnp.allclose(cell, c_ref, atol=1e-5, rtol=1e-5)

    print("KERNEL_OK")
</pallas_src>

<mosaic_0001>
module attributes {stable_mosaic.version = 11 : i64} {
  func.func @_encoder_kernel(%arg0: memref<32x16xf32, #tpu.memory_space<vmem>>, %arg1: memref<16x128xf32, #tpu.memory_space<vmem>>, %arg2: memref<32x128xf32, #tpu.memory_space<vmem>>, %arg3: memref<1x128xf32, #tpu.memory_space<vmem>>, %arg4: memref<32x128xf32, #tpu.memory_space<vmem>>, %arg5: memref<32x128xf32, #tpu.memory_space<vmem>>, %arg6: memref<1x128xf32, #tpu.memory_space<vmem>>, %arg7: memref<2x4x32xf32, #tpu.memory_space<vmem>>, %arg8: memref<2x4x32xf32, #tpu.memory_space<vmem>>, %arg9: memref<32x128xf32, #tpu.memory_space<vmem>>, %arg10: memref<32x32xf32, #tpu.memory_space<vmem>>) attributes {dimension_semantics = [], scalar_prefetch = 0 : i64, scratch_operands = 2 : i64, tpu.core_type = #tpu.core_type<tc>} {
    %0 = tpu.iota {dimensions = array<i32: 1>} : vector<1x128xi32>
    %c64_i32 = arith.constant 64 : i32
    %1 = vector.broadcast %c64_i32 : i32 to vector<1x128xi32>
    %2 = arith.cmpi sge, %0, %1 : vector<1x128xi32>
    %c96_i32 = arith.constant 96 : i32
    %3 = vector.broadcast %c96_i32 : i32 to vector<1x128xi32>
    %4 = arith.cmpi slt, %0, %3 : vector<1x128xi32>
    %5 = arith.andi %2, %4 : vector<1x128xi1>
    %cst = arith.constant 0.000000e+00 : f32
    %6 = vector.broadcast %cst : f32 to vector<4x32xf32>
    %c0 = arith.constant 0 : index
    %c0_0 = arith.constant 0 : index
    %7 = vector.load %arg0[%c0, %c0_0] : memref<32x16xf32, #tpu.memory_space<vmem>>, vector<32x16xf32>
    %c0_1 = arith.constant 0 : index
    %c0_2 = arith.constant 0 : index
    %8 = vector.load %arg1[%c0_1, %c0_2] : memref<16x128xf32, #tpu.memory_space<vmem>>, vector<16x128xf32>
    %cst_3 = arith.constant dense<0.000000e+00> : vector<32x128xf32>
    %9 = tpu.matmul %7, %8, %cst_3 {dimension_numbers = #tpu.dot_dimension_numbers<[1], [0], [0], [1], [0, 0, 1, 1], [], []>} : vector<32x16xf32>, vector<16x128xf32>, vector<32x128xf32> -> vector<32x128xf32>
    %c0_4 = arith.constant 0 : index
    %c0_5 = arith.constant 0 : index
    %10 = vector.load %arg3[%c0_4, %c0_5] : memref<1x128xf32, #tpu.memory_space<vmem>>, vector<1x128xf32>
    %11 = vector.broadcast %10 : vector<1x128xf32> to vector<32x128xf32>
    %12 = arith.addf %9, %11 : vector<32x128xf32>
    %c0_6 = arith.constant 0 : index
    %c0_7 = arith.constant 0 : index
    %13 = vector.load %arg9[%c0_6, %c0_7] : memref<32x128xf32, #tpu.memory_space<vmem>>, vector<32x128xf32>
    tpu.vector_store %arg9[%c0_6, %c0_7], %12 {strides = array<i32>} : memref<32x128xf32, #tpu.memory_space<vmem>>, vector<32x128xf32>,
    %c0_8 = arith.constant 0 : index
    %c0_9 = arith.constant 0 : index
    %14 = vector.load %arg2[%c0_8, %c0_9] : memref<32x128xf32, #tpu.memory_space<vmem>>, vector<32x128xf32>
    %c0_i32 = arith.constant 0 : i32
    %c4_i32 = arith.constant 4 : i32
    %15 = arith.muli %c0_i32, %c4_i32 : i32
    %16 = arith.index_cast %15 : i32 to index
    %c0_10 = arith.constant 0 : index
    %17 = vector.load %arg9[%16, %c0_10] : memref<32x128xf32, #tpu.memory_space<vmem>>, vector<4x128xf32>
    %cst_11 = arith.constant dense<0.000000e+00> : vector<4x128xf32>
    %18 = tpu.matmul %6, %14, %cst_11 {dimension_numbers = #tpu.dot_dimension_numbers<[1], [0], [0], [1], [0, 0, 1, 1], [], []>} : vector<4x32xf32>, vector<32x128xf32>, vector<4x128xf32> -> vector<4x128xf32>
    %19 = arith.addf %17, %18 : vector<4x128xf32>
    %20 = arith.negf %19 : vector<4x128xf32>
    %21 = math.exp %20 : vector<4x128xf32>
    %cst_12 = arith.constant 1.000000e+00 : f32
    %22 = vector.broadcast %cst_12 : f32 to vector<4x128xf32>
    %23 = arith.addf %22, %21 : vector<4x128xf32>
    %24 = arith.divf %22, %23 : vector<4x128xf32>
    %25 = math.tanh %19 : vector<4x128xf32>
    %26 = vector.shape_cast %5 : vector<1x128xi1> to vector<1x128xi1>
    %27 = vector.broadcast %26 : vector<1x128xi1> to vector<4x128xi1>
    %28 = arith.select %27, %25, %24 : vector<4x128xi1>, vector<4x128xf32>
    %29 = vector.extract_strided_slice %28 {offsets = [0, 0], sizes = [4, 32], strides = [1, 1]} : vector<4x128xf32> to vector<4x32xf32>
    %30 = vector.extract_strided_slice %28 {offsets = [0, 32], sizes = [4, 32], strides = [1, 1]} : vector<4x128xf32> to vector<4x32xf32>
    %31 = vector.extract_strided_slice %28 {offsets = [0, 64], sizes = [4, 32], strides = [1, 1]} : vector<4x128xf32> to vector<4x32xf32>
    %32 = vector.extract_strided_slice %28 {offsets = [0, 96], sizes = [4, 32], strides = [1, 1]} : vector<4x128xf32> to vector<4x32xf32>
    %33 = arith.mulf %30, %6 : vector<4x32xf32>
    %34 = arith.mulf %29, %31 : vector<4x32xf32>
    %35 = arith.addf %33, %34 : vector<4x32xf32>
    %36 = math.tanh %35 : vector<4x32xf32>
    %37 = arith.mulf %32, %36 : vector<4x32xf32>
    %c4_i32_13 = arith.constant 4 : i32
    %38 = arith.muli %c0_i32, %c4_i32_13 : i32
    %39 = arith.index_cast %38 : i32 to index
    %c0_14 = arith.constant 0 : index
    %40 = vector.load %arg10[%39, %c0_14] : memref<32x32xf32, #tpu.memory_space<vmem>>, vector<4x32xf32>
    tpu.vector_store %arg10[%39, %c0_14], %37 {strides = array<i32>} : memref<32x32xf32, #tpu.memory_space<vmem>>, vector<4x32xf32>,
    %c1_i32 = arith.constant 1 : i32
    %c4_i32_15 = arith.constant 4 : i32
    %41 = arith.muli %c1_i32, %c4_i32_15 : i32
    %42 = arith.index_cast %41 : i32 to index
    %c0_16 = arith.constant 0 : index
    %43 = vector.load %arg9[%42, %c0_16] : memref<32x128xf32, #tpu.memory_space<vmem>>, vector<4x128xf32>
    %cst_17 = arith.constant dense<0.000000e+00> : vector<4x128xf32>
    %44 = tpu.matmul %37, %14, %cst_17 {dimension_numbers = #tpu.dot_dimension_numbers<[1], [0], [0], [1], [0, 0, 1, 1], [], []>} : vector<4x32xf32>, vector<32x128xf32>, vector<4x128xf32> -> vector<4x128xf32>
    %45 = arith.addf %43, %44 : vector<4x128xf32>
    %46 = arith.negf %45 : vector<4x128xf32>
    %47 = math.exp %46 : vector<4x128xf32>
    %cst_18 = arith.constant 1.000000e+00 : f32
    %48 = vector.broadcast %cst_18 : f32 to vector<4x128xf32>
    %49 = arith.addf %48, %47 : vector<4x128xf32>
    %50 = arith.divf %48, %49 : vector<4x128xf32>
    %51 = math.tanh %45 : vector<4x128xf32>
    %52 = vector.shape_cast %5 : vector<1x128xi1> to vector<1x128xi1>
    %53 = vector.broadcast %52 : vector<1x128xi1> to vector<4x128xi1>
    %54 = arith.select %53, %51, %50 : vector<4x128xi1>, vector<4x128xf32>
    %55 = vector.extract_strided_slice %54 {offsets = [0, 0], sizes = [4, 32], strides = [1, 1]} : vector<4x128xf32> to vector<4x32xf32>
    %56 = vector.extract_strided_slice %54 {offsets = [0, 32], sizes = [4, 32], strides = [1, 1]} : vector<4x128xf32> to vector<4x32xf32>
    %57 = vector.extract_strided_slice %54 {offsets = [0, 64], sizes = [4, 32], strides = [1, 1]} : vector<4x128xf32> to vector<4x32xf32>
    %58 = vector.extract_strided_slice %54 {offsets = [0, 96], sizes = [4, 32], strides = [1, 1]} : vector<4x128xf32> to vector<4x32xf32>
    %59 = arith.mulf %56, %35 : vector<4x32xf32>
    %60 = arith.mulf %55, %57 : vector<4x32xf32>
    %61 = arith.addf %59, %60 : vector<4x32xf32>
    %62 = math.tanh %61 : vector<4x32xf32>
    %63 = arith.mulf %58, %62 : vector<4x32xf32>
    %c4_i32_19 = arith.constant 4 : i32
    %64 = arith.muli %c1_i32, %c4_i32_19 : i32
    %65 = arith.index_cast %64 : i32 to index
    %c0_20 = arith.constant 0 : index
    %66 = vector.load %arg10[%65, %c0_20] : memref<32x32xf32, #tpu.memory_space<vmem>>, vector<4x32xf32>
    tpu.vector_store %arg10[%65, %c0_20], %63 {strides = array<i32>} : memref<32x32xf32, #tpu.memory_space<vmem>>, vector<4x32xf32>,
    %c2_i32 = arith.constant 2 : i32
    %c4_i32_21 = arith.constant 4 : i32
    %67 = arith.muli %c2_i32, %c4_i32_21 : i32
    %68 = arith.index_cast %67 : i32 to index
    %c0_22 = arith.constant 0 : index
    %69 = vector.load %arg9[%68, %c0_22] : memref<32x128xf32, #tpu.memory_space<vmem>>, vector<4x128xf32>
    %cst_23 = arith.constant dense<0.000000e+00> : vector<4x128xf32>
    %70 = tpu.matmul %63, %14, %cst_23 {dimension_numbers = #tpu.dot_dimension_numbers<[1], [0], [0], [1], [0, 0, 1, 1], [], []>} : vector<4x32xf32>, vector<32x128xf32>, vector<4x128xf32> -> vector<4x128xf32>
    %71 = arith.addf %69, %70 : vector<4x128xf32>
    %72 = arith.negf %71 : vector<4x128xf32>
    %73 = math.exp %72 : vector<4x128xf32>
    %cst_24 = arith.constant 1.000000e+00 : f32
    %74 = vector.broadcast %cst_24 : f32 to vector<4x128xf32>
    %75 = arith.addf %74, %73 : vector<4x128xf32>
    %76 = arith.divf %74, %75 : vector<4x128xf32>
    %77 = math.tanh %71 : vector<4x128xf32>
    %78 = vector.shape_cast %5 : vector<1x128xi1> to vector<1x128xi1>
    %79 = vector.broadcast %78 : vector<1x128xi1> to vector<4x128xi1>
    %80 = arith.select %79, %77, %76 : vector<4x128xi1>, vector<4x128xf32>
    %81 = vector.extract_strided_slice %80 {offsets = [0, 0], sizes = [4, 32], strides = [1, 1]} : vector<4x128xf32> to vector<4x32xf32>
    %82 = vector.extract_strided_slice %80 {offsets = [0, 32], sizes = [4, 32], strides = [1, 1]} : vector<4x128xf32> to vector<4x32xf32>
    %83 = vector.extract_strided_slice %80 {offsets = [0, 64], sizes = [4, 32], strides = [1, 1]} : vector<4x128xf32> to vector<4x32xf32>
    %84 = vector.extract_strided_slice %80 {offsets = [0, 96], sizes = [4, 32], strides = [1, 1]} : vector<4x128xf32> to vector<4x32xf32>
    %85 = arith.mulf %82, %61 : vector<4x32xf32>
    %86 = arith.mulf %81, %83 : vector<4x32xf32>
    %87 = arith.addf %85, %86 : vector<4x32xf32>
    %88 = math.tanh %87 : vector<4x32xf32>
    %89 = arith.mulf %84, %88 : vector<4x32xf32>
    %c4_i32_25 = arith.constant 4 : i32
    %90 = arith.muli %c2_i32, %c4_i32_25 : i32
    %91 = arith.index_cast %90 : i32 to index
    %c0_26 = arith.constant 0 : index
    %92 = vector.load %arg10[%91, %c0_26] : memref<32x32xf32, #tpu.memory_space<vmem>>, vector<4x32xf32>
    tpu.vector_store %arg10[%91, %c0_26], %89 {strides = array<i32>} : memref<32x32xf32, #tpu.memory_space<vmem>>, vector<4x32xf32>,
    %c3_i32 = arith.constant 3 : i32
    %c4_i32_27 = arith.constant 4 : i32
    %93 = arith.muli %c3_i32, %c4_i32_27 : i32
    %94 = arith.index_cast %93 : i32 to index
    %c0_28 = arith.constant 0 : index
    %95 = vector.load %arg9[%94, %c0_28] : memref<32x128xf32, #tpu.memory_space<vmem>>, vector<4x128xf32>
    %cst_29 = arith.constant dense<0.000000e+00> : vector<4x128xf32>
    %96 = tpu.matmul %89, %14, %cst_29 {dimension_numbers = #tpu.dot_dimension_numbers<[1], [0], [0], [1], [0, 0, 1, 1], [], []>} : vector<4x32xf32>, vector<32x128xf32>, vector<4x128xf32> -> vector<4x128xf32>
    %97 = arith.addf %95, %96 : vector<4x128xf32>
    %98 = arith.negf %97 : vector<4x128xf32>
    %99 = math.exp %98 : vector<4x128xf32>
    %cst_30 = arith.constant 1.000000e+00 : f32
    %100 = vector.broadcast %cst_30 : f32 to vector<4x128xf32>
    %101 = arith.addf %100, %99 : vector<4x128xf32>
    %102 = arith.divf %100, %101 : vector<4x128xf32>
    %103 = math.tanh %97 : vector<4x128xf32>
    %104 = vector.shape_cast %5 : vector<1x128xi1> to vector<1x128xi1>
    %105 = vector.broadcast %104 : vector<1x128xi1> to vector<4x128xi1>
    %106 = arith.select %105, %103, %102 : vector<4x128xi1>, vector<4x128xf32>
    %107 = vector.extract_strided_slice %106 {offsets = [0, 0], sizes = [4, 32], strides = [1, 1]} : vector<4x128xf32> to vector<4x32xf32>
    %108 = vector.extract_strided_slice %106 {offsets = [0, 32], sizes = [4, 32], strides = [1, 1]} : vector<4x128xf32> to vector<4x32xf32>
    %109 = vector.extract_strided_slice %106 {offsets = [0, 64], sizes = [4, 32], strides = [1, 1]} : vector<4x128xf32> to vector<4x32xf32>
    %110 = vector.extract_strided_slice %106 {offsets = [0, 96], sizes = [4, 32], strides = [1, 1]} : vector<4x128xf32> to vector<4x32xf32>
    %111 = arith.mulf %108, %87 : vector<4x32xf32>
    %112 = arith.mulf %107, %109 : vector<4x32xf32>
    %113 = arith.addf %111, %112 : vector<4x32xf32>
    %114 = math.tanh %113 : vector<4x32xf32>
    %115 = arith.mulf %110, %114 : vector<4x32xf32>
    %c4_i32_31 = arith.constant 4 : i32
    %116 = arith.muli %c3_i32, %c4_i32_31 : i32
    %117 = arith.index_cast %116 : i32 to index
    %c0_32 = arith.constant 0 : index
    %118 = vector.load %arg10[%117, %c0_32] : memref<32x32xf32, #tpu.memory_space<vmem>>, vector<4x32xf32>
    tpu.vector_store %arg10[%117, %c0_32], %115 {strides = array<i32>} : memref<32x32xf32, #tpu.memory_space<vmem>>, vector<4x32xf32>,
    %c4_i32_33 = arith.constant 4 : i32
    %c4_i32_34 = arith.constant 4 : i32
    %119 = arith.muli %c4_i32_33, %c4_i32_34 : i32
    %120 = arith.index_cast %119 : i32 to index
    %c0_35 = arith.constant 0 : index
    %121 = vector.load %arg9[%120, %c0_35] : memref<32x128xf32, #tpu.memory_space<vmem>>, vector<4x128xf32>
    %cst_36 = arith.constant dense<0.000000e+00> : vector<4x128xf32>
    %122 = tpu.matmul %115, %14, %cst_36 {dimension_numbers = #tpu.dot_dimension_numbers<[1], [0], [0], [1], [0, 0, 1, 1], [], []>} : vector<4x32xf32>, vector<32x128xf32>, vector<4x128xf32> -> vector<4x128xf32>
    %123 = arith.addf %121, %122 : vector<4x128xf32>
    %124 = arith.negf %123 : vector<4x128xf32>
    %125 = math.exp %124 : vector<4x128xf32>
    %cst_37 = arith.constant 1.000000e+00 : f32
    %126 = vector.broadcast %cst_37 : f32 to vector<4x128xf32>
    %127 = arith.addf %126, %125 : vector<4x128xf32>
    %128 = arith.divf %126, %127 : vector<4x128xf32>
    %129 = math.tanh %123 : vector<4x128xf32>
    %130 = vector.shape_cast %5 : vector<1x128xi1> to vector<1x128xi1>
    %131 = vector.broadcast %130 : vector<1x128xi1> to vector<4x128xi1>
    %132 = arith.select %131, %129, %128 : vector<4x128xi1>, vector<4x128xf32>
    %133 = vector.extract_strided_slice %132 {offsets = [0, 0], sizes = [4, 32], strides = [1, 1]} : vector<4x128xf32> to vector<4x32xf32>
    %134 = vector.extract_strided_slice %132 {offsets = [0, 32], sizes = [4, 32], strides = [1, 1]} : vector<4x128xf32> to vector<4x32xf32>
    %135 = vector.extract_strided_slice %132 {offsets = [0, 64], sizes = [4, 32], strides = [1, 1]} : vector<4x128xf32> to vector<4x32xf32>
    %136 = vector.extract_strided_slice %132 {offsets = [0, 96], sizes = [4, 32], strides = [1, 1]} : vector<4x128xf32> to vector<4x32xf32>
    %137 = arith.mulf %134, %113 : vector<4x32xf32>
    %138 = arith.mulf %133, %135 : vector<4x32xf32>
    %139 = arith.addf %137, %138 : vector<4x32xf32>
    %140 = math.tanh %139 : vector<4x32xf32>
    %141 = arith.mulf %136, %140 : vector<4x32xf32>
    %c4_i32_38 = arith.constant 4 : i32
    %142 = arith.muli %c4_i32_33, %c4_i32_38 : i32
    %143 = arith.index_cast %142 : i32 to index
    %c0_39 = arith.constant 0 : index
    %144 = vector.load %arg10[%143, %c0_39] : memref<32x32xf32, #tpu.memory_space<vmem>>, vector<4x32xf32>
    tpu.vector_store %arg10[%143, %c0_39], %141 {strides = array<i32>} : memref<32x32xf32, #tpu.memory_space<vmem>>, vector<4x32xf32>,
    %c5_i32 = arith.constant 5 : i32
    %c4_i32_40 = arith.constant 4 : i32
    %145 = arith.muli %c5_i32, %c4_i32_40 : i32
    %146 = arith.index_cast %145 : i32 to index
    %c0_41 = arith.constant 0 : index
    %147 = vector.load %arg9[%146, %c0_41] : memref<32x128xf32, #tpu.memory_space<vmem>>, vector<4x128xf32>
    %cst_42 = arith.constant dense<0.000000e+00> : vector<4x128xf32>
    %148 = tpu.matmul %141, %14, %cst_42 {dimension_numbers = #tpu.dot_dimension_numbers<[1], [0], [0], [1], [0, 0, 1, 1], [], []>} : vector<4x32xf32>, vector<32x128xf32>, vector<4x128xf32> -> vector<4x128xf32>
    %149 = arith.addf %147, %148 : vector<4x128xf32>
    %150 = arith.negf %149 : vector<4x128xf32>
    %151 = math.exp %150 : vector<4x128xf32>
    %cst_43 = arith.constant 1.000000e+00 : f32
    %152 = vector.broadcast %cst_43 : f32 to vector<4x128xf32>
    %153 = arith.addf %152, %151 : vector<4x128xf32>
    %154 = arith.divf %152, %153 : vector<4x128xf32>
    %155 = math.tanh %149 : vector<4x128xf32>
    %156 = vector.shape_cast %5 : vector<1x128xi1> to vector<1x128xi1>
    %157 = vector.broadcast %156 : vector<1x128xi1> to vector<4x128xi1>
    %158 = arith.select %157, %155, %154 : vector<4x128xi1>, vector<4x128xf32>
    %159 = vector.extract_strided_slice %158 {offsets = [0, 0], sizes = [4, 32], strides = [1, 1]} : vector<4x128xf32> to vector<4x32xf32>
    %160 = vector.extract_strided_slice %158 {offsets = [0, 32], sizes = [4, 32], strides = [1, 1]} : vector<4x128xf32> to vector<4x32xf32>
    %161 = vector.extract_strided_slice %158 {offsets = [0, 64], sizes = [4, 32], strides = [1, 1]} : vector<4x128xf32> to vector<4x32xf32>
    %162 = vector.extract_strided_slice %158 {offsets = [0, 96], sizes = [4, 32], strides = [1, 1]} : vector<4x128xf32> to vector<4x32xf32>
    %163 = arith.mulf %160, %139 : vector<4x32xf32>
    %164 = arith.mulf %159, %161 : vector<4x32xf32>
    %165 = arith.addf %163, %164 : vector<4x32xf32>
    %166 = math.tanh %165 : vector<4x32xf32>
    %167 = arith.mulf %162, %166 : vector<4x32xf32>
    %c4_i32_44 = arith.constant 4 : i32
    %168 = arith.muli %c5_i32, %c4_i32_44 : i32
    %169 = arith.index_cast %168 : i32 to index
    %c0_45 = arith.constant 0 : index
    %170 = vector.load %arg10[%169, %c0_45] : memref<32x32xf32, #tpu.memory_space<vmem>>, vector<4x32xf32>
    tpu.vector_store %arg10[%169, %c0_45], %167 {strides = array<i32>} : memref<32x32xf32, #tpu.memory_space<vmem>>, vector<4x32xf32>,
    %c6_i32 = arith.constant 6 : i32
    %c4_i32_46 = arith.constant 4 : i32
    %171 = arith.muli %c6_i32, %c4_i32_46 : i32
    %172 = arith.index_cast %171 : i32 to index
    %c0_47 = arith.constant 0 : index
    %173 = vector.load %arg9[%172, %c0_47] : memref<32x128xf32, #tpu.memory_space<vmem>>, vector<4x128xf32>
    %cst_48 = arith.constant dense<0.000000e+00> : vector<4x128xf32>
    %174 = tpu.matmul %167, %14, %cst_48 {dimension_numbers = #tpu.dot_dimension_numbers<[1], [0], [0], [1], [0, 0, 1, 1], [], []>} : vector<4x32xf32>, vector<32x128xf32>, vector<4x128xf32> -> vector<4x128xf32>
    %175 = arith.addf %173, %174 : vector<4x128xf32>
    %176 = arith.negf %175 : vector<4x128xf32>
    %177 = math.exp %176 : vector<4x128xf32>
    %cst_49 = arith.constant 1.000000e+00 : f32
    %178 = vector.broadcast %cst_49 : f32 to vector<4x128xf32>
    %179 = arith.addf %178, %177 : vector<4x128xf32>
    %180 = arith.divf %178, %179 : vector<4x128xf32>
    %181 = math.tanh %175 : vector<4x128xf32>
    %182 = vector.shape_cast %5 : vector<1x128xi1> to vector<1x128xi1>
    %183 = vector.broadcast %182 : vector<1x128xi1> to vector<4x128xi1>
    %184 = arith.select %183, %181, %180 : vector<4x128xi1>, vector<4x128xf32>
    %185 = vector.extract_strided_slice %184 {offsets = [0, 0], sizes = [4, 32], strides = [1, 1]} : vector<4x128xf32> to vector<4x32xf32>
    %186 = vector.extract_strided_slice %184 {offsets = [0, 32], sizes = [4, 32], strides = [1, 1]} : vector<4x128xf32> to vector<4x32xf32>
    %187 = vector.extract_strided_slice %184 {offsets = [0, 64], sizes = [4, 32], strides = [1, 1]} : vector<4x128xf32> to vector<4x32xf32>
    %188 = vector.extract_strided_slice %184 {offsets = [0, 96], sizes = [4, 32], strides = [1, 1]} : vector<4x128xf32> to vector<4x32xf32>
    %189 = arith.mulf %186, %165 : vector<4x32xf32>
    %190 = arith.mulf %185, %187 : vector<4x32xf32>
    %191 = arith.addf %189, %190 : vector<4x32xf32>
    %192 = math.tanh %191 : vector<4x32xf32>
    %193 = arith.mulf %188, %192 : vector<4x32xf32>
    %c4_i32_50 = arith.constant 4 : i32
    %194 = arith.muli %c6_i32, %c4_i32_50 : i32
    %195 = arith.index_cast %194 : i32 to index
    %c0_51 = arith.constant 0 : index
    %196 = vector.load %arg10[%195, %c0_51] : memref<32x32xf32, #tpu.memory_space<vmem>>, vector<4x32xf32>
    tpu.vector_store %arg10[%195, %c0_51], %193 {strides = array<i32>} : memref<32x32xf32, #tpu.memory_space<vmem>>, vector<4x32xf32>,
    %c7_i32 = arith.constant 7 : i32
    %c4_i32_52 = arith.constant 4 : i32
    %197 = arith.muli %c7_i32, %c4_i32_52 : i32
    %198 = arith.index_cast %197 : i32 to index
    %c0_53 = arith.constant 0 : index
    %199 = vector.load %arg9[%198, %c0_53] : memref<32x128xf32, #tpu.memory_space<vmem>>, vector<4x128xf32>
    %cst_54 = arith.constant dense<0.000000e+00> : vector<4x128xf32>
    %200 = tpu.matmul %193, %14, %cst_54 {dimension_numbers = #tpu.dot_dimension_numbers<[1], [0], [0], [1], [0, 0, 1, 1], [], []>} : vector<4x32xf32>, vector<32x128xf32>, vector<4x128xf32> -> vector<4x128xf32>
    %201 = arith.addf %199, %200 : vector<4x128xf32>
    %202 = arith.negf %201 : vector<4x128xf32>
    %203 = math.exp %202 : vector<4x128xf32>
    %cst_55 = arith.constant 1.000000e+00 : f32
    %204 = vector.broadcast %cst_55 : f32 to vector<4x128xf32>
    %205 = arith.addf %204, %203 : vector<4x128xf32>
    %206 = arith.divf %204, %205 : vector<4x128xf32>
    %207 = math.tanh %201 : vector<4x128xf32>
    %208 = vector.shape_cast %5 : vector<1x128xi1> to vector<1x128xi1>
    %209 = vector.broadcast %208 : vector<1x128xi1> to vector<4x128xi1>
    %210 = arith.select %209, %207, %206 : vector<4x128xi1>, vector<4x128xf32>
    %211 = vector.extract_strided_slice %210 {offsets = [0, 0], sizes = [4, 32], strides = [1, 1]} : vector<4x128xf32> to vector<4x32xf32>
    %212 = vector.extract_strided_slice %210 {offsets = [0, 32], sizes = [4, 32], strides = [1, 1]} : vector<4x128xf32> to vector<4x32xf32>
    %213 = vector.extract_strided_slice %210 {offsets = [0, 64], sizes = [4, 32], strides = [1, 1]} : vector<4x128xf32> to vector<4x32xf32>
    %214 = vector.extract_strided_slice %210 {offsets = [0, 96], sizes = [4, 32], strides = [1, 1]} : vector<4x128xf32> to vector<4x32xf32>
    %215 = arith.mulf %212, %191 : vector<4x32xf32>
    %216 = arith.mulf %211, %213 : vector<4x32xf32>
    %217 = arith.addf %215, %216 : vector<4x32xf32>
    %218 = math.tanh %217 : vector<4x32xf32>
    %219 = arith.mulf %214, %218 : vector<4x32xf32>
    %c4_i32_56 = arith.constant 4 : i32
    %220 = arith.muli %c7_i32, %c4_i32_56 : i32
    %221 = arith.index_cast %220 : i32 to index
    %c0_57 = arith.constant 0 : index
    %222 = vector.load %arg10[%221, %c0_57] : memref<32x32xf32, #tpu.memory_space<vmem>>, vector<4x32xf32>
    tpu.vector_store %arg10[%221, %c0_57], %219 {strides = array<i32>} : memref<32x32xf32, #tpu.memory_space<vmem>>, vector<4x32xf32>,
    %c8_i32 = arith.constant 8 : i32
    %c0_58 = arith.constant 0 : index
    %c0_59 = arith.constant 0 : index
    %c0_60 = arith.constant 0 : index
    %223 = vector.load %arg7[%c0_58, %c0_59, %c0_60] : memref<2x4x32xf32, #tpu.memory_space<vmem>>, vector<1x4x32xf32>
    %224 = vector.shape_cast %223 : vector<1x4x32xf32> to vector<4x32xf32>
    %225 = vector.shape_cast %219 : vector<4x32xf32> to vector<1x4x32xf32>
    tpu.vector_store %arg7[%c0_58, %c0_59, %c0_60], %225 {strides = array<i32>} : memref<2x4x32xf32, #tpu.memory_space<vmem>>, vector<1x4x32xf32>,
    %c0_61 = arith.constant 0 : index
    %c0_62 = arith.constant 0 : index
    %c0_63 = arith.constant 0 : index
    %226 = vector.load %arg8[%c0_61, %c0_62, %c0_63] : memref<2x4x32xf32, #tpu.memory_space<vmem>>, vector<1x4x32xf32>
    %227 = vector.shape_cast %226 : vector<1x4x32xf32> to vector<4x32xf32>
    %228 = vector.shape_cast %217 : vector<4x32xf32> to vector<1x4x32xf32>
    tpu.vector_store %arg8[%c0_61, %c0_62, %c0_63], %228 {strides = array<i32>} : memref<2x4x32xf32, #tpu.memory_space<vmem>>, vector<1x4x32xf32>,
    %c0_64 = arith.constant 0 : index
    %c0_65 = arith.constant 0 : index
    %229 = vector.load %arg10[%c0_64, %c0_65] : memref<32x32xf32, #tpu.memory_space<vmem>>, vector<32x32xf32>
    %c0_66 = arith.constant 0 : index
    %c0_67 = arith.constant 0 : index
    %230 = vector.load %arg4[%c0_66, %c0_67] : memref<32x128xf32, #tpu.memory_space<vmem>>, vector<32x128xf32>
    %cst_68 = arith.constant dense<0.000000e+00> : vector<32x128xf32>
    %231 = tpu.matmul %229, %230, %cst_68 {dimension_numbers = #tpu.dot_dimension_numbers<[1], [0], [0], [1], [0, 0, 1, 1], [], []>} : vector<32x32xf32>, vector<32x128xf32>, vector<32x128xf32> -> vector<32x128xf32>
    %c0_69 = arith.constant 0 : index
    %c0_70 = arith.constant 0 : index
    %232 = vector.load %arg6[%c0_69, %c0_70] : memref<1x128xf32, #tpu.memory_space<vmem>>, vector<1x128xf32>
    %233 = vector.broadcast %232 : vector<1x128xf32> to vector<32x128xf32>
    %234 = arith.addf %231, %233 : vector<32x128xf32>
    %c0_71 = arith.constant 0 : index
    %c0_72 = arith.constant 0 : index
    %235 = vector.load %arg9[%c0_71, %c0_72] : memref<32x128xf32, #tpu.memory_space<vmem>>, vector<32x128xf32>
    tpu.vector_store %arg9[%c0_71, %c0_72], %234 {strides = array<i32>} : memref<32x128xf32, #tpu.memory_space<vmem>>, vector<32x128xf32>,
    %c0_73 = arith.constant 0 : index
    %c0_74 = arith.constant 0 : index
    %236 = vector.load %arg5[%c0_73, %c0_74] : memref<32x128xf32, #tpu.memory_space<vmem>>, vector<32x128xf32>
    %c0_i32_75 = arith.constant 0 : i32
    %c4_i32_76 = arith.constant 4 : i32
    %237 = arith.muli %c0_i32_75, %c4_i32_76 : i32
    %238 = arith.index_cast %237 : i32 to index
    %c0_77 = arith.constant 0 : index
    %239 = vector.load %arg9[%238, %c0_77] : memref<32x128xf32, #tpu.memory_space<vmem>>, vector<4x128xf32>
    %cst_78 = arith.constant dense<0.000000e+00> : vector<4x128xf32>
    %240 = tpu.matmul %6, %236, %cst_78 {dimension_numbers = #tpu.dot_dimension_numbers<[1], [0], [0], [1], [0, 0, 1, 1], [], []>} : vector<4x32xf32>, vector<32x128xf32>, vector<4x128xf32> -> vector<4x128xf32>
    %241 = arith.addf %239, %240 : vector<4x128xf32>
    %242 = arith.negf %241 : vector<4x128xf32>
    %243 = math.exp %242 : vector<4x128xf32>
    %cst_79 = arith.constant 1.000000e+00 : f32
    %244 = vector.broadcast %cst_79 : f32 to vector<4x128xf32>
    %245 = arith.addf %244, %243 : vector<4x128xf32>
    %246 = arith.divf %244, %245 : vector<4x128xf32>
    %247 = math.tanh %241 : vector<4x128xf32>
    %248 = vector.shape_cast %5 : vector<1x128xi1> to vector<1x128xi1>
    %249 = vector.broadcast %248 : vector<1x128xi1> to vector<4x128xi1>
    %250 = arith.select %249, %247, %246 : vector<4x128xi1>, vector<4x128xf32>
    %251 = vector.extract_strided_slice %250 {offsets = [0, 0], sizes = [4, 32], strides = [1, 1]} : vector<4x128xf32> to vector<4x32xf32>
    %252 = vector.extract_strided_slice %250 {offsets = [0, 32], sizes = [4, 32], strides = [1, 1]} : vector<4x128xf32> to vector<4x32xf32>
    %253 = vector.extract_strided_slice %250 {offsets = [0, 64], sizes = [4, 32], strides = [1, 1]} : vector<4x128xf32> to vector<4x32xf32>
    %254 = vector.extract_strided_slice %250 {offsets = [0, 96], sizes = [4, 32], strides = [1, 1]} : vector<4x128xf32> to vector<4x32xf32>
    %255 = arith.mulf %252, %6 : vector<4x32xf32>
    %256 = arith.mulf %251, %253 : vector<4x32xf32>
    %257 = arith.addf %255, %256 : vector<4x32xf32>
    %258 = math.tanh %257 : vector<4x32xf32>
    %259 = arith.mulf %254, %258 : vector<4x32xf32>
    %c1_i32_80 = arith.constant 1 : i32
    %c4_i32_81 = arith.constant 4 : i32
    %260 = arith.muli %c1_i32_80, %c4_i32_81 : i32
    %261 = arith.index_cast %260 : i32 to index
    %c0_82 = arith.constant 0 : index
    %262 = vector.load %arg9[%261, %c0_82] : memref<32x128xf32, #tpu.memory_space<vmem>>, vector<4x128xf32>
    %cst_83 = arith.constant dense<0.000000e+00> : vector<4x128xf32>
    %263 = tpu.matmul %259, %236, %cst_83 {dimension_numbers = #tpu.dot_dimension_numbers<[1], [0], [0], [1], [0, 0, 1, 1], [], []>} : vector<4x32xf32>, vector<32x128xf32>, vector<4x128xf32> -> vector<4x128xf32>
    %264 = arith.addf %262, %263 : vector<4x128xf32>
    %265 = arith.negf %264 : vector<4x128xf32>
    %266 = math.exp %265 : vector<4x128xf32>
    %cst_84 = arith.constant 1.000000e+00 : f32
    %267 = vector.broadcast %cst_84 : f32 to vector<4x128xf32>
    %268 = arith.addf %267, %266 : vector<4x128xf32>
    %269 = arith.divf %267, %268 : vector<4x128xf32>
    %270 = math.tanh %264 : vector<4x128xf32>
    %271 = vector.shape_cast %5 : vector<1x128xi1> to vector<1x128xi1>
    %272 = vector.broadcast %271 : vector<1x128xi1> to vector<4x128xi1>
    %273 = arith.select %272, %270, %269 : vector<4x128xi1>, vector<4x128xf32>
    %274 = vector.extract_strided_slice %273 {offsets = [0, 0], sizes = [4, 32], strides = [1, 1]} : vector<4x128xf32> to vector<4x32xf32>
    %275 = vector.extract_strided_slice %273 {offsets = [0, 32], sizes = [4, 32], strides = [1, 1]} : vector<4x128xf32> to vector<4x32xf32>
    %276 = vector.extract_strided_slice %273 {offsets = [0, 64], sizes = [4, 32], strides = [1, 1]} : vector<4x128xf32> to vector<4x32xf32>
    %277 = vector.extract_strided_slice %273 {offsets = [0, 96], sizes = [4, 32], strides = [1, 1]} : vector<4x128xf32> to vector<4x32xf32>
    %278 = arith.mulf %275, %257 : vector<4x32xf32>
    %279 = arith.mulf %274, %276 : vector<4x32xf32>
    %280 = arith.addf %278, %279 : vector<4x32xf32>
    %281 = math.tanh %280 : vector<4x32xf32>
    %282 = arith.mulf %277, %281 : vector<4x32xf32>
    %c2_i32_85 = arith.constant 2 : i32
    %c4_i32_86 = arith.constant 4 : i32
    %283 = arith.muli %c2_i32_85, %c4_i32_86 : i32
    %284 = arith.index_cast %283 : i32 to index
    %c0_87 = arith.constant 0 : index
    %285 = vector.load %arg9[%284, %c0_87] : memref<32x128xf32, #tpu.memory_space<vmem>>, vector<4x128xf32>
    %cst_88 = arith.constant dense<0.000000e+00> : vector<4x128xf32>
    %286 = tpu.matmul %282, %236, %cst_88 {dimension_numbers = #tpu.dot_dimension_numbers<[1], [0], [0], [1], [0, 0, 1, 1], [], []>} : vector<4x32xf32>, vector<32x128xf32>, vector<4x128xf32> -> vector<4x128xf32>
    %287 = arith.addf %285, %286 : vector<4x128xf32>
    %288 = arith.negf %287 : vector<4x128xf32>
    %289 = math.exp %288 : vector<4x128xf32>
    %cst_89 = arith.constant 1.000000e+00 : f32
    %290 = vector.broadcast %cst_89 : f32 to vector<4x128xf32>
    %291 = arith.addf %290, %289 : vector<4x128xf32>
    %292 = arith.divf %290, %291 : vector<4x128xf32>
    %293 = math.tanh %287 : vector<4x128xf32>
    %294 = vector.shape_cast %5 : vector<1x128xi1> to vector<1x128xi1>
    %295 = vector.broadcast %294 : vector<1x128xi1> to vector<4x128xi1>
    %296 = arith.select %295, %293, %292 : vector<4x128xi1>, vector<4x128xf32>
    %297 = vector.extract_strided_slice %296 {offsets = [0, 0], sizes = [4, 32], strides = [1, 1]} : vector<4x128xf32> to vector<4x32xf32>
    %298 = vector.extract_strided_slice %296 {offsets = [0, 32], sizes = [4, 32], strides = [1, 1]} : vector<4x128xf32> to vector<4x32xf32>
    %299 = vector.extract_strided_slice %296 {offsets = [0, 64], sizes = [4, 32], strides = [1, 1]} : vector<4x128xf32> to vector<4x32xf32>
    %300 = vector.extract_strided_slice %296 {offsets = [0, 96], sizes = [4, 32], strides = [1, 1]} : vector<4x128xf32> to vector<4x32xf32>
    %301 = arith.mulf %298, %280 : vector<4x32xf32>
    %302 = arith.mulf %297, %299 : vector<4x32xf32>
    %303 = arith.addf %301, %302 : vector<4x32xf32>
    %304 = math.tanh %303 : vector<4x32xf32>
    %305 = arith.mulf %300, %304 : vector<4x32xf32>
    %c3_i32_90 = arith.constant 3 : i32
    %c4_i32_91 = arith.constant 4 : i32
    %306 = arith.muli %c3_i32_90, %c4_i32_91 : i32
    %307 = arith.index_cast %306 : i32 to index
    %c0_92 = arith.constant 0 : index
    %308 = vector.load %arg9[%307, %c0_92] : memref<32x128xf32, #tpu.memory_space<vmem>>, vector<4x128xf32>
    %cst_93 = arith.constant dense<0.000000e+00> : vector<4x128xf32>
    %309 = tpu.matmul %305, %236, %cst_93 {dimension_numbers = #tpu.dot_dimension_numbers<[1], [0], [0], [1], [0, 0, 1, 1], [], []>} : vector<4x32xf32>, vector<32x128xf32>, vector<4x128xf32> -> vector<4x128xf32>
    %310 = arith.addf %308, %309 : vector<4x128xf32>
    %311 = arith.negf %310 : vector<4x128xf32>
    %312 = math.exp %311 : vector<4x128xf32>
    %cst_94 = arith.constant 1.000000e+00 : f32
    %313 = vector.broadcast %cst_94 : f32 to vector<4x128xf32>
    %314 = arith.addf %313, %312 : vector<4x128xf32>
    %315 = arith.divf %313, %314 : vector<4x128xf32>
    %316 = math.tanh %310 : vector<4x128xf32>
    %317 = vector.shape_cast %5 : vector<1x128xi1> to vector<1x128xi1>
    %318 = vector.broadcast %317 : vector<1x128xi1> to vector<4x128xi1>
    %319 = arith.select %318, %316, %315 : vector<4x128xi1>, vector<4x128xf32>
    %320 = vector.extract_strided_slice %319 {offsets = [0, 0], sizes = [4, 32], strides = [1, 1]} : vector<4x128xf32> to vector<4x32xf32>
    %321 = vector.extract_strided_slice %319 {offsets = [0, 32], sizes = [4, 32], strides = [1, 1]} : vector<4x128xf32> to vector<4x32xf32>
    %322 = vector.extract_strided_slice %319 {offsets = [0, 64], sizes = [4, 32], strides = [1, 1]} : vector<4x128xf32> to vector<4x32xf32>
    %323 = vector.extract_strided_slice %319 {offsets = [0, 96], sizes = [4, 32], strides = [1, 1]} : vector<4x128xf32> to vector<4x32xf32>
    %324 = arith.mulf %321, %303 : vector<4x32xf32>
    %325 = arith.mulf %320, %322 : vector<4x32xf32>
    %326 = arith.addf %324, %325 : vector<4x32xf32>
    %327 = math.tanh %326 : vector<4x32xf32>
    %328 = arith.mulf %323, %327 : vector<4x32xf32>
    %c4_i32_95 = arith.constant 4 : i32
    %c4_i32_96 = arith.constant 4 : i32
    %329 = arith.muli %c4_i32_95, %c4_i32_96 : i32
    %330 = arith.index_cast %329 : i32 to index
    %c0_97 = arith.constant 0 : index
    %331 = vector.load %arg9[%330, %c0_97] : memref<32x128xf32, #tpu.memory_space<vmem>>, vector<4x128xf32>
    %cst_98 = arith.constant dense<0.000000e+00> : vector<4x128xf32>
    %332 = tpu.matmul %328, %236, %cst_98 {dimension_numbers = #tpu.dot_dimension_numbers<[1], [0], [0], [1], [0, 0, 1, 1], [], []>} : vector<4x32xf32>, vector<32x128xf32>, vector<4x128xf32> -> vector<4x128xf32>
    %333 = arith.addf %331, %332 : vector<4x128xf32>
    %334 = arith.negf %333 : vector<4x128xf32>
    %335 = math.exp %334 : vector<4x128xf32>
    %cst_99 = arith.constant 1.000000e+00 : f32
    %336 = vector.broadcast %cst_99 : f32 to vector<4x128xf32>
    %337 = arith.addf %336, %335 : vector<4x128xf32>
    %338 = arith.divf %336, %337 : vector<4x128xf32>
    %339 = math.tanh %333 : vector<4x128xf32>
    %340 = vector.shape_cast %5 : vector<1x128xi1> to vector<1x128xi1>
    %341 = vector.broadcast %340 : vector<1x128xi1> to vector<4x128xi1>
    %342 = arith.select %341, %339, %338 : vector<4x128xi1>, vector<4x128xf32>
    %343 = vector.extract_strided_slice %342 {offsets = [0, 0], sizes = [4, 32], strides = [1, 1]} : vector<4x128xf32> to vector<4x32xf32>
    %344 = vector.extract_strided_slice %342 {offsets = [0, 32], sizes = [4, 32], strides = [1, 1]} : vector<4x128xf32> to vector<4x32xf32>
    %345 = vector.extract_strided_slice %342 {offsets = [0, 64], sizes = [4, 32], strides = [1, 1]} : vector<4x128xf32> to vector<4x32xf32>
    %346 = vector.extract_strided_slice %342 {offsets = [0, 96], sizes = [4, 32], strides = [1, 1]} : vector<4x128xf32> to vector<4x32xf32>
    %347 = arith.mulf %344, %326 : vector<4x32xf32>
    %348 = arith.mulf %343, %345 : vector<4x32xf32>
    %349 = arith.addf %347, %348 : vector<4x32xf32>
    %350 = math.tanh %349 : vector<4x32xf32>
    %351 = arith.mulf %346, %350 : vector<4x32xf32>
    %c5_i32_100 = arith.constant 5 : i32
    %c4_i32_101 = arith.constant 4 : i32
    %352 = arith.muli %c5_i32_100, %c4_i32_101 : i32
    %353 = arith.index_cast %352 : i32 to index
    %c0_102 = arith.constant 0 : index
    %354 = vector.load %arg9[%353, %c0_102] : memref<32x128xf32, #tpu.memory_space<vmem>>, vector<4x128xf32>
    %cst_103 = arith.constant dense<0.000000e+00> : vector<4x128xf32>
    %355 = tpu.matmul %351, %236, %cst_103 {dimension_numbers = #tpu.dot_dimension_numbers<[1], [0], [0], [1], [0, 0, 1, 1], [], []>} : vector<4x32xf32>, vector<32x128xf32>, vector<4x128xf32> -> vector<4x128xf32>
    %356 = arith.addf %354, %355 : vector<4x128xf32>
    %357 = arith.negf %356 : vector<4x128xf32>
    %358 = math.exp %357 : vector<4x128xf32>
    %cst_104 = arith.constant 1.000000e+00 : f32
    %359 = vector.broadcast %cst_104 : f32 to vector<4x128xf32>
    %360 = arith.addf %359, %358 : vector<4x128xf32>
    %361 = arith.divf %359, %360 : vector<4x128xf32>
    %362 = math.tanh %356 : vector<4x128xf32>
    %363 = vector.shape_cast %5 : vector<1x128xi1> to vector<1x128xi1>
    %364 = vector.broadcast %363 : vector<1x128xi1> to vector<4x128xi1>
    %365 = arith.select %364, %362, %361 : vector<4x128xi1>, vector<4x128xf32>
    %366 = vector.extract_strided_slice %365 {offsets = [0, 0], sizes = [4, 32], strides = [1, 1]} : vector<4x128xf32> to vector<4x32xf32>
    %367 = vector.extract_strided_slice %365 {offsets = [0, 32], sizes = [4, 32], strides = [1, 1]} : vector<4x128xf32> to vector<4x32xf32>
    %368 = vector.extract_strided_slice %365 {offsets = [0, 64], sizes = [4, 32], strides = [1, 1]} : vector<4x128xf32> to vector<4x32xf32>
    %369 = vector.extract_strided_slice %365 {offsets = [0, 96], sizes = [4, 32], strides = [1, 1]} : vector<4x128xf32> to vector<4x32xf32>
    %370 = arith.mulf %367, %349 : vector<4x32xf32>
    %371 = arith.mulf %366, %368 : vector<4x32xf32>
    %372 = arith.addf %370, %371 : vector<4x32xf32>
    %373 = math.tanh %372 : vector<4x32xf32>
    %374 = arith.mulf %369, %373 : vector<4x32xf32>
    %c6_i32_105 = arith.constant 6 : i32
    %c4_i32_106 = arith.constant 4 : i32
    %375 = arith.muli %c6_i32_105, %c4_i32_106 : i32
    %376 = arith.index_cast %375 : i32 to index
    %c0_107 = arith.constant 0 : index
    %377 = vector.load %arg9[%376, %c0_107] : memref<32x128xf32, #tpu.memory_space<vmem>>, vector<4x128xf32>
    %cst_108 = arith.constant dense<0.000000e+00> : vector<4x128xf32>
    %378 = tpu.matmul %374, %236, %cst_108 {dimension_numbers = #tpu.dot_dimension_numbers<[1], [0], [0], [1], [0, 0, 1, 1], [], []>} : vector<4x32xf32>, vector<32x128xf32>, vector<4x128xf32> -> vector<4x128xf32>
    %379 = arith.addf %377, %378 : vector<4x128xf32>
    %380 = arith.negf %379 : vector<4x128xf32>
    %381 = math.exp %380 : vector<4x128xf32>
    %cst_109 = arith.constant 1.000000e+00 : f32
    %382 = vector.broadcast %cst_109 : f32 to vector<4x128xf32>
    %383 = arith.addf %382, %381 : vector<4x128xf32>
    %384 = arith.divf %382, %383 : vector<4x128xf32>
    %385 = math.tanh %379 : vector<4x128xf32>
    %386 = vector.shape_cast %5 : vector<1x128xi1> to vector<1x128xi1>
    %387 = vector.broadcast %386 : vector<1x128xi1> to vector<4x128xi1>
    %388 = arith.select %387, %385, %384 : vector<4x128xi1>, vector<4x128xf32>
    %389 = vector.extract_strided_slice %388 {offsets = [0, 0], sizes = [4, 32], strides = [1, 1]} : vector<4x128xf32> to vector<4x32xf32>
    %390 = vector.extract_strided_slice %388 {offsets = [0, 32], sizes = [4, 32], strides = [1, 1]} : vector<4x128xf32> to vector<4x32xf32>
    %391 = vector.extract_strided_slice %388 {offsets = [0, 64], sizes = [4, 32], strides = [1, 1]} : vector<4x128xf32> to vector<4x32xf32>
    %392 = vector.extract_strided_slice %388 {offsets = [0, 96], sizes = [4, 32], strides = [1, 1]} : vector<4x128xf32> to vector<4x32xf32>
    %393 = arith.mulf %390, %372 : vector<4x32xf32>
    %394 = arith.mulf %389, %391 : vector<4x32xf32>
    %395 = arith.addf %393, %394 : vector<4x32xf32>
    %396 = math.tanh %395 : vector<4x32xf32>
    %397 = arith.mulf %392, %396 : vector<4x32xf32>
    %c7_i32_110 = arith.constant 7 : i32
    %c4_i32_111 = arith.constant 4 : i32
    %398 = arith.muli %c7_i32_110, %c4_i32_111 : i32
    %399 = arith.index_cast %398 : i32 to index
    %c0_112 = arith.constant 0 : index
    %400 = vector.load %arg9[%399, %c0_112] : memref<32x128xf32, #tpu.memory_space<vmem>>, vector<4x128xf32>
    %cst_113 = arith.constant dense<0.000000e+00> : vector<4x128xf32>
    %401 = tpu.matmul %397, %236, %cst_113 {dimension_numbers = #tpu.dot_dimension_numbers<[1], [0], [0], [1], [0, 0, 1, 1], [], []>} : vector<4x32xf32>, vector<32x128xf32>, vector<4x128xf32> -> vector<4x128xf32>
    %402 = arith.addf %400, %401 : vector<4x128xf32>
    %403 = arith.negf %402 : vector<4x128xf32>
    %404 = math.exp %403 : vector<4x128xf32>
    %cst_114 = arith.constant 1.000000e+00 : f32
    %405 = vector.broadcast %cst_114 : f32 to vector<4x128xf32>
    %406 = arith.addf %405, %404 : vector<4x128xf32>
    %407 = arith.divf %405, %406 : vector<4x128xf32>
    %408 = math.tanh %402 : vector<4x128xf32>
    %409 = vector.shape_cast %5 : vector<1x128xi1> to vector<1x128xi1>
    %410 = vector.broadcast %409 : vector<1x128xi1> to vector<4x128xi1>
    %411 = arith.select %410, %408, %407 : vector<4x128xi1>, vector<4x128xf32>
    %412 = vector.extract_strided_slice %411 {offsets = [0, 0], sizes = [4, 32], strides = [1, 1]} : vector<4x128xf32> to vector<4x32xf32>
    %413 = vector.extract_strided_slice %411 {offsets = [0, 32], sizes = [4, 32], strides = [1, 1]} : vector<4x128xf32> to vector<4x32xf32>
    %414 = vector.extract_strided_slice %411 {offsets = [0, 64], sizes = [4, 32], strides = [1, 1]} : vector<4x128xf32> to vector<4x32xf32>
    %415 = vector.extract_strided_slice %411 {offsets = [0, 96], sizes = [4, 32], strides = [1, 1]} : vector<4x128xf32> to vector<4x32xf32>
    %416 = arith.mulf %413, %395 : vector<4x32xf32>
    %417 = arith.mulf %412, %414 : vector<4x32xf32>
    %418 = arith.addf %416, %417 : vector<4x32xf32>
    %419 = math.tanh %418 : vector<4x32xf32>
    %420 = arith.mulf %415, %419 : vector<4x32xf32>
    %c8_i32_115 = arith.constant 8 : i32
    %c1 = arith.constant 1 : index
    %c0_116 = arith.constant 0 : index
    %c0_117 = arith.constant 0 : index
    %421 = vector.load %arg7[%c1, %c0_116, %c0_117] : memref<2x4x32xf32, #tpu.memory_space<vmem>>, vector<1x4x32xf32>
    %422 = vector.shape_cast %421 : vector<1x4x32xf32> to vector<4x32xf32>
    %423 = vector.shape_cast %420 : vector<4x32xf32> to vector<1x4x32xf32>
    tpu.vector_store %arg7[%c1, %c0_116, %c0_117], %423 {strides = array<i32>} : memref<2x4x32xf32, #tpu.memory_space<vmem>>, vector<1x4x32xf32>,
    %c1_118 = arith.constant 1 : index
    %c0_119 = arith.constant 0 : index
    %c0_120 = arith.constant 0 : index
    %424 = vector.load %arg8[%c1_118, %c0_119, %c0_120] : memref<2x4x32xf32, #tpu.memory_space<vmem>>, vector<1x4x32xf32>
    %425 = vector.shape_cast %424 : vector<1x4x32xf32> to vector<4x32xf32>
    %426 = vector.shape_cast %418 : vector<4x32xf32> to vector<1x4x32xf32>
    tpu.vector_store %arg8[%c1_118, %c0_119, %c0_120], %426 {strides = array<i32>} : memref<2x4x32xf32, #tpu.memory_space<vmem>>, vector<1x4x32xf32>,
    return
  }
}

</mosaic_0001>

<llo_original>
// kernel: encoder_forward.1
$region0: #{encoder_forward.1}
  #allocation0 [shape = 'u32[]', space=smem, size = 0x4, offset = 0x4, fixed_abs, tag = 'smem constant byte address 0x4 - core index']
  #allocation1 [shape = 'u32[144,128]{1,0:T(1,128)}', space=vmem, size = 0x12000, scoped, tag = 'internal scratch']
  #allocation2 [shape = 'f32[32,128]{1,0:T(8,128)}', space=vmem, size = 0x4000, scoped, tag = 'scratch operand']
  #allocation3 [shape = 'f32[32,32]{1,0:T(8,128)}', space=vmem, size = 0x4000, scoped, tag = 'scratch operand']
  %s0 = inlined_call_operand.vmem [shape: f32[32,16], index: 0, kind: input, shape index: {}]
  %s1 = inlined_call_operand.hbm [shape: f32[16,128], index: 1, kind: input, shape index: {}]
  %s2 = inlined_call_operand.vmem [shape: f32[32,128], index: 2, kind: input, shape index: {}]
  %s3 = inlined_call_operand.vmem [shape: f32[1,128], index: 3, kind: input, shape index: {}]
  %s4 = inlined_call_operand.vmem [shape: f32[32,128], index: 4, kind: input, shape index: {}]
  %s5 = inlined_call_operand.hbm [shape: f32[32,128], index: 5, kind: input, shape index: {}]
  %s6 = inlined_call_operand.vmem [shape: f32[1,128], index: 6, kind: input, shape index: {}]
  %s7 = inlined_call_operand.hbm [shape: f32[2,4,32], index: 7, kind: output, shape index: {0}]
  %s8 = inlined_call_operand.hbm [shape: f32[2,4,32], index: 8, kind: output, shape index: {1}]
  %9 = xla_tuple %s7, %s8
  %s10 = sld [smem:[#allocation0]]
  $region54: #{encoder_forward.1} parent=0
    _
  %s12 = ssub.s32 1, %s10
  %s13 = scalar_select 0, %s12, %s10
  $region1: #{encoder_forward.1} parent=0
    #allocation4 [shape = 'u8[8192]{0}', space=vmem, size = 0x2000, scoped, tag = 'input window, operand 1, single buffered']
    #allocation5 [shape = 's32[1]{0}', space=sflag, size = 0x4, scoped, tag = 'scoped memory for encoder_forward.1']
    #allocation6 [shape = 's32[1]{0}', space=sflag, size = 0x4, scoped, tag = 'scoped memory for encoder_forward.1']
    #allocation7 [shape = 'u8[16384]{0}', space=vmem, size = 0x4000, scoped, tag = 'input window, operand 5, single buffered']
    #allocation8 [shape = 's32[1]{0}', space=sflag, size = 0x4, scoped, tag = 'scoped memory for encoder_forward.1']
    #allocation9 [shape = 'u8[4096]{0}', space=vmem, size = 0x1000, scoped, tag = 'output window, operand 0, single buffered']
    #allocation10 [shape = 'u8[4096]{0}', space=vmem, size = 0x1000, scoped, tag = 'output window, operand 1, single buffered']
    #allocation11 [shape = 's32[1]{0}', space=sflag, size = 0x4, scoped, tag = 'scoped memory for encoder_forward.1']
    %14 = vsyncpa [#allocation5], 0
    %15 = vsyncpa [#allocation8], 0
    %16 = vsyncpa [#allocation6], 0
    %17 = vsyncpa [#allocation11], 0
    // Predicated region
    $region2: #{encoder_forward.1} parent=1 // pred_check
      _
    $region3: #{encoder_forward.1} parent=1 // pred_check_branch
      %19 = sbr.rel (0) target = $region5
    $region4: #{encoder_forward.1} parent=1 // pred_region
      _
    $region5: #{encoder_forward.1} parent=1 // pred_fallthru
      _
    // Predicated region
    $region6: #{encoder_forward.1} parent=1 // pred_check
      _
    $region7: #{encoder_forward.1} parent=1 // pred_check_branch
      %21 = sbr.rel (0) target = $region9
    $region8: #{encoder_forward.1} parent=1 // pred_region
      %s23 = ssub.s32 256, 256
      %24 = vsyncadd [#allocation5], %s23
      %s25 = sshll.u32 [#allocation4], 4
      %s26 = int_to_ptr.vmem [resolvable:$true] %s25
      %31 = dma.hbm_to_vmem [thread:$0]  %s1, 256, %s26, [#allocation5], 128, 128, 8
    $region9: #{encoder_forward.1} parent=1 // pred_fallthru
      _
    // Predicated region
    $region10: #{encoder_forward.1} parent=1 // pred_check
      _
    $region11: #{encoder_forward.1} parent=1 // pred_check_branch
      %33 = sbr.rel (0) target = $region13
    $region12: #{encoder_forward.1} parent=1 // pred_region
      _
    $region13: #{encoder_forward.1} parent=1 // pred_fallthru
      _
    // Predicated region
    $region14: #{encoder_forward.1} parent=1 // pred_check
      _
    $region15: #{encoder_forward.1} parent=1 // pred_check_branch
      %35 = sbr.rel (0) target = $region17
    $region16: #{encoder_forward.1} parent=1 // pred_region
      _
    $region17: #{encoder_forward.1} parent=1 // pred_fallthru
      _
    // Predicated region
    $region18: #{encoder_forward.1} parent=1 // pred_check
      _
    $region19: #{encoder_forward.1} parent=1 // pred_check_branch
      %37 = sbr.rel (0) target = $region21
    $region20: #{encoder_forward.1} parent=1 // pred_region
      _
    $region21: #{encoder_forward.1} parent=1 // pred_fallthru
      _
    // Predicated region
    $region22: #{encoder_forward.1} parent=1 // pred_check
      _
    $region23: #{encoder_forward.1} parent=1 // pred_check_branch
      %39 = sbr.rel (0) target = $region25
    $region24: #{encoder_forward.1} parent=1 // pred_region
      %s41 = ssub.s32 512, 512
      %42 = vsyncadd [#allocation8], %s41
      %s43 = sshll.u32 [#allocation7], 4
      %s44 = int_to_ptr.vmem [resolvable:$true] %s43
      %49 = dma.hbm_to_vmem [thread:$0]  %s5, 512, %s44, [#allocation8], 128, 128, 8
    $region25: #{encoder_forward.1} parent=1 // pred_fallthru
      _
    // Predicated region
    $region26: #{encoder_forward.1} parent=1 // pred_check
      _
    $region27: #{encoder_forward.1} parent=1 // pred_check_branch
      %51 = sbr.rel (0) target = $region29
    $region28: #{encoder_forward.1} parent=1 // pred_region
      _
    $region29: #{encoder_forward.1} parent=1 // pred_fallthru
      _
    // Predicated region
    $region30: #{encoder_forward.1} parent=1 // pred_check
      _
    $region31: #{encoder_forward.1} parent=1 // pred_check_branch
      %53 = sbr.rel (0) target = $region33
    $region32: #{encoder_forward.1} parent=1 // pred_region
      %54 = dma.done [#allocation5], 256
    $region33: #{encoder_forward.1} parent=1 // pred_fallthru
      _
    // Predicated region
    $region34: #{encoder_forward.1} parent=1 // pred_check
      _
    $region35: #{encoder_forward.1} parent=1 // pred_check_branch
      %56 = sbr.rel (0) target = $region37
    $region36: #{encoder_forward.1} parent=1 // pred_region
      %57 = dma.done [#allocation8], 512
    $region37: #{encoder_forward.1} parent=1 // pred_fallthru
      _
    %v58 = vlaneseq
    %v59 = vand.u32 %v58, 127
    %vm60 = vcmp.ge.s32.totalorder %v59, 64
    %vm61 = vcmp.lt.s32.totalorder %v59, 96
    %vm62 = vmand %vm60, %vm61
    %v63 = vld [vmem:[%s0] sm:$0xff]
    %v64 = vld [vmem:[%s0 + $0x8] sm:$0xff]
    %v65 = vld [vmem:[%s0 + $0x10] sm:$0xff]
    %v66 = vld [vmem:[%s0 + $0x18] sm:$0xff]
    %v67 = vld [vmem:[#allocation4] sm:$0xff]
    %v68 = vld [vmem:[#allocation4 + $0x8] sm:$0xff]
    %v69 = vld [vmem:[%s3] sm:$0x1]
    %v71 = vlaneseq
    %v72 = vshrl.u32 %v71, 7
    %v73 = vsub.s32 0, %v72
    %v74 = vrot.slane %v69, %v73
    %vm76 = vcmask 130048
    %v78 = vsel %vm76, %v63, 0
    %v81 = vsel %vm76, %v64, 0
    %v84 = vsel %vm76, %v65, 0
    %v87 = vsel %vm76, %v66, 0
    %89 = vmatprep.subr.mxu0 0.0
    %90 = vmatpush1.msra.mxu0 %v67
    %91 = vmatprep.subr.mxu0 0.0
    %92 = vmatpush1.msra.mxu0 %v68
    %93 = vmatprep.subr.mxu0 0.0
    %94 = vmatpush1.msra.mxu0 0.0
    %95 = vmatprep.subr.mxu0 0.0
    %96 = vmatpush1.msra.mxu0 0.0
    %97 = vmatprep.subr.mxu0 0.0
    %98 = vmatpush1.msra.mxu0 0.0
    %99 = vmatprep.subr.mxu0 0.0
    %100 = vmatpush1.msra.mxu0 0.0
    %101 = vmatprep.subr.mxu0 0.0
    %102 = vmatpush1.msra.mxu0 0.0
    %103 = vmatprep.subr.mxu0 0.0
    %104 = vmatpush1.msra.mxu0 0.0
    %105 = vmatprep.subr.mxu0 0.0
    %106 = vmatpush1.msra.mxu0 0.0
    %107 = vmatprep.subr.mxu0 0.0
    %108 = vmatpush1.msra.mxu0 0.0
    %109 = vmatprep.subr.mxu0 0.0
    %110 = vmatpush1.msra.mxu0 0.0
    %111 = vmatprep.subr.mxu0 0.0
    %112 = vmatpush1.msra.mxu0 0.0
    %113 = vmatprep.subr.mxu0 0.0
    %114 = vmatpush1.msra.mxu0 0.0
    %115 = vmatprep.subr.mxu0 0.0
    %116 = vmatpush1.msra.mxu0 0.0
    %117 = vmatprep.subr.mxu0 0.0
    %118 = vmatpush1.msra.mxu0 0.0
    %119 = vmatprep.subr.mxu0 0.0
    %120 = vmatpush1.msra.mxu0 0.0
    %121 = vmatprep.subr.mxu0 0.0
    %122 = vmatpush1.msra.mxu0 0.0
    %123 = vmatprep.subr.mxu0 0.0
    %124 = vmatpush1.msra.mxu0 0.0
    %125 = vmatprep.subr.mxu0 0.0
    %126 = vmatpush1.msra.mxu0 0.0
    %127 = vmatprep.subr.mxu0 0.0
    %128 = vmatpush1.msra.mxu0 0.0
    %129 = vmatprep.subr.mxu0 0.0
    %130 = vmatpush1.msra.mxu0 0.0
    %131 = vmatprep.subr.mxu0 0.0
    %132 = vmatpush1.msra.mxu0 0.0
    %133 = vmatprep.subr.mxu0 0.0
    %134 = vmatpush1.msra.mxu0 0.0
    %135 = vmatprep.subr.mxu0 0.0
    %136 = vmatpush1.msra.mxu0 0.0
    %137 = vmatprep.subr.mxu0 0.0
    %138 = vmatpush1.msra.mxu0 0.0
    %139 = vmatprep.subr.mxu0 0.0
    %140 = vmatpush1.msra.mxu0 0.0
    %141 = vmatprep.subr.mxu0 0.0
    %142 = vmatpush1.msra.mxu0 0.0
    %143 = vmatprep.subr.mxu0 0.0
    %144 = vmatpush1.msra.mxu0 0.0
    %145 = vmatprep.subr.mxu0 0.0
    %146 = vmatpush1.msra.mxu0 0.0
    %147 = vmatprep.subr.mxu0 0.0
    %148 = vmatpush1.msra.mxu0 0.0
    %149 = vmatprep.subr.mxu0 0.0
    %150 = vmatpush1.msra.mxu0 0.0
    %151 = vmatprep.subr.mxu0 0.0
    %152 = vmatpush1.msra.mxu0 0.0
    %153 = vmatprep.mubr.f32.mxu0 0.0
    %154 = vmatmul.mubr.f32.gmra.mrb[0].mxu0 %v78
    %v155 = vpop.f32.mrb[0].mxu0
    %v156 = vadd.f32 %v74, %v155
    %v157 = vpop.f32.mrb[0].mxu0
    %158 = vmatprep.mubr.f32.mxu0 0.0
    %159 = vmatmul.mubr.f32.gmra.mrb[0].mxu0 %v81
    %v160 = vpop.f32.mrb[0].mxu0
    %v161 = vadd.f32 %v74, %v160
    %v162 = vpop.f32.mrb[0].mxu0
    %163 = vmatprep.mubr.f32.mxu0 0.0
    %164 = vmatmul.mubr.f32.gmra.mrb[0].mxu0 %v84
    %v165 = vpop.f32.mrb[0].mxu0
    %v166 = vadd.f32 %v74, %v165
    %v167 = vpop.f32.mrb[0].mxu0
    %168 = vmatprep.mubr.f32.mxu0 0.0
    %169 = vmatmul.mubr.f32.gmra.mrb[0].mxu0 %v87
    %v170 = vpop.f32.mrb[0].mxu0
    %v171 = vadd.f32 %v74, %v170
    %v172 = vpop.f32.mrb[0].mxu0
    %173 = vdwg.mxu0
    %174 = vst [vmem:[#allocation2] sm:$0xff] %v156
    %175 = vst [vmem:[#allocation2 + $0x8] sm:$0xff] %v161
    %176 = vst [vmem:[#allocation2 + $0x10] sm:$0xff] %v166
    %177 = vst [vmem:[#allocation2 + $0x18] sm:$0xff] %v171
    %v178 = vld [vmem:[%s2] sm:$0xff]
    %v179 = vld [vmem:[%s2 + $0x8] sm:$0xff]
    %v180 = vld [vmem:[%s2 + $0x10] sm:$0xff]
    %v181 = vld [vmem:[%s2 + $0x18] sm:$0xff]
    %v182 = vld [vmem:[#allocation2] sm:$0xf]
    %vm183 = vcmask 261120
    %v185 = vsel %vm183, 0.0, 0
    %187 = vmatprep.subr.mxu0 0.0
    %188 = vmatpush1.msra.mxu0 %v178
    %189 = vmatprep.subr.mxu0 0.0
    %190 = vmatpush1.msra.mxu0 %v179
    %191 = vmatprep.subr.mxu0 0.0
    %192 = vmatpush1.msra.mxu0 %v180
    %193 = vmatprep.subr.mxu0 0.0
    %194 = vmatpush1.msra.mxu0 %v181
    %195 = vmatprep.subr.mxu0 0.0
    %196 = vmatpush1.msra.mxu0 0.0
    %197 = vmatprep.subr.mxu0 0.0
    %198 = vmatpush1.msra.mxu0 0.0
    %199 = vmatprep.subr.mxu0 0.0
    %200 = vmatpush1.msra.mxu0 0.0
    %201 = vmatprep.subr.mxu0 0.0
    %202 = vmatpush1.msra.mxu0 0.0
    %203 = vmatprep.subr.mxu0 0.0
    %204 = vmatpush1.msra.mxu0 0.0
    %205 = vmatprep.subr.mxu0 0.0
    %206 = vmatpush1.msra.mxu0 0.0
    %207 = vmatprep.subr.mxu0 0.0
    %208 = vmatpush1.msra.mxu0 0.0
    %209 = vmatprep.subr.mxu0 0.0
    %210 = vmatpush1.msra.mxu0 0.0
    %211 = vmatprep.subr.mxu0 0.0
    %212 = vmatpush1.msra.mxu0 0.0
    %213 = vmatprep.subr.mxu0 0.0
    %214 = vmatpush1.msra.mxu0 0.0
    %215 = vmatprep.subr.mxu0 0.0
    %216 = vmatpush1.msra.mxu0 0.0
    %217 = vmatprep.subr.mxu0 0.0
    %218 = vmatpush1.msra.mxu0 0.0
    %219 = vmatprep.subr.mxu0 0.0
    %220 = vmatpush1.msra.mxu0 0.0
    %221 = vmatprep.subr.mxu0 0.0
    %222 = vmatpush1.msra.mxu0 0.0
    %223 = vmatprep.subr.mxu0 0.0
    %224 = vmatpush1.msra.mxu0 0.0
    %225 = vmatprep.subr.mxu0 0.0
    %226 = vmatpush1.msra.mxu0 0.0
    %227 = vmatprep.subr.mxu0 0.0
    %228 = vmatpush1.msra.mxu0 0.0
    %229 = vmatprep.subr.mxu0 0.0
    %230 = vmatpush1.msra.mxu0 0.0
    %231 = vmatprep.subr.mxu0 0.0
    %232 = vmatpush1.msra.mxu0 0.0
    %233 = vmatprep.subr.mxu0 0.0
    %234 = vmatpush1.msra.mxu0 0.0
    %235 = vmatprep.subr.mxu0 0.0
    %236 = vmatpush1.msra.mxu0 0.0
    %237 = vmatprep.subr.mxu0 0.0
    %238 = vmatpush1.msra.mxu0 0.0
    %239 = vmatprep.subr.mxu0 0.0
    %240 = vmatpush1.msra.mxu0 0.0
    %241 = vmatprep.subr.mxu0 0.0
    %242 = vmatpush1.msra.mxu0 0.0
    %243 = vmatprep.subr.mxu0 0.0
    %244 = vmatpush1.msra.mxu0 0.0
    %245 = vmatprep.subr.mxu0 0.0
    %246 = vmatpush1.msra.mxu0 0.0
    %247 = vmatprep.subr.mxu0 0.0
    %248 = vmatpush1.msra.mxu0 0.0
    %249 = vmatprep.subr.mxu0 0.0
    %250 = vmatpush1.msra.mxu0 0.0
    %251 = vmatprep.mubr.f32.mxu0 0.0
    %252 = vmatmul.mubr.f32.gmra.mrb[0].mxu0 %v185
    %v253 = vpop.f32.mrb[0].mxu0
    %v254 = vadd.f32 0.0, %v253
    %v255 = vpop.f32.mrb[0].mxu0
    %256 = vdwg.mxu0
    %v257 = vadd.f32 %v182, %v254
    %v258 = vxor.u32 %v257, 2147483648
    %v259 = vmul.f32 %v258, 1.442695
    %v260 = vpow.pop %v259
    %v261 = vadd.f32 %v260, 1.0
    %v262 = vrcp.pop %v261
    %v263 = vmul.f32 1.0, %v262
    %v264 = vtanh.pop %v257
    %v265 = vsel %vm62, 1, 0
    %vm266 = vcmp.eq.s32.totalorder %v265, 1
    %v267 = vsel %vm266, %v264, %v263
    %v268 = vmul.f32 %v267, 0.0
    %270 = vrot.lane.b32.xlu0 %v267, 64
    %v271 = vpop.permute.xlu0 %270
    %v273 = vmul.f32 %v267, %v271
    %275 = vrot.lane.b32.xlu0 %v273, 32
    %v276 = vpop.permute.xlu0 %275
    %v278 = vadd.f32 %v268, %v276
    %v279 = vtanh.pop %v278
    %281 = vrot.lane.b32.xlu0 %v279, 64
    %v282 = vpop.permute.xlu0 %281
    %v284 = vmul.f32 %v267, %v282
    %286 = vrot.lane.b32.xlu0 %v284, 32
    %v287 = vpop.permute.xlu0 %286
    %vm289 = vcmask 257024
    %290 = vst.msk [vmem:[#allocation3] sm:$0xf] %vm289, %v287
    %v291 = vld [vmem:[#allocation2 + $0x4] sm:$0xf]
    %v292 = vsel %vm183, %v287, 0
    %294 = vmatprep.subr.mxu0 0.0
    %295 = vmatpush1.msra.mxu0 %v178
    %296 = vmatprep.subr.mxu0 0.0
    %297 = vmatpush1.msra.mxu0 %v179
    %298 = vmatprep.subr.mxu0 0.0
    %299 = vmatpush1.msra.mxu0 %v180
    %300 = vmatprep.subr.mxu0 0.0
    %301 = vmatpush1.msra.mxu0 %v181
    %302 = vmatprep.subr.mxu0 0.0
    %303 = vmatpush1.msra.mxu0 0.0
    %304 = vmatprep.subr.mxu0 0.0
    %305 = vmatpush1.msra.mxu0 0.0
    %306 = vmatprep.subr.mxu0 0.0
    %307 = vmatpush1.msra.mxu0 0.0
    %308 = vmatprep.subr.mxu0 0.0
    %309 = vmatpush1.msra.mxu0 0.0
    %310 = vmatprep.subr.mxu0 0.0
    %311 = vmatpush1.msra.mxu0 0.0
    %312 = vmatprep.subr.mxu0 0.0
    %313 = vmatpush1.msra.mxu0 0.0
    %314 = vmatprep.subr.mxu0 0.0
    %315 = vmatpush1.msra.mxu0 0.0
    %316 = vmatprep.subr.mxu0 0.0
    %317 = vmatpush1.msra.mxu0 0.0
    %318 = vmatprep.subr.mxu0 0.0
    %319 = vmatpush1.msra.mxu0 0.0
    %320 = vmatprep.subr.mxu0 0.0
    %321 = vmatpush1.msra.mxu0 0.0
    %322 = vmatprep.subr.mxu0 0.0
    %323 = vmatpush1.msra.mxu0 0.0
    %324 = vmatprep.subr.mxu0 0.0
    %325 = vmatpush1.msra.mxu0 0.0
    %326 = vmatprep.subr.mxu0 0.0
    %327 = vmatpush1.msra.mxu0 0.0
    %328 = vmatprep.subr.mxu0 0.0
    %329 = vmatpush1.msra.mxu0 0.0
    %330 = vmatprep.subr.mxu0 0.0
    %331 = vmatpush1.msra.mxu0 0.0
    %332 = vmatprep.subr.mxu0 0.0
    %333 = vmatpush1.msra.mxu0 0.0
    %334 = vmatprep.subr.mxu0 0.0
    %335 = vmatpush1.msra.mxu0 0.0
    %336 = vmatprep.subr.mxu0 0.0
    %337 = vmatpush1.msra.mxu0 0.0
    %338 = vmatprep.subr.mxu0 0.0
    %339 = vmatpush1.msra.mxu0 0.0
    %340 = vmatprep.subr.mxu0 0.0
    %341 = vmatpush1.msra.mxu0 0.0
    %342 = vmatprep.subr.mxu0 0.0
    %343 = vmatpush1.msra.mxu0 0.0
    %344 = vmatprep.subr.mxu0 0.0
    %345 = vmatpush1.msra.mxu0 0.0
    %346 = vmatprep.subr.mxu0 0.0
    %347 = vmatpush1.msra.mxu0 0.0
    %348 = vmatprep.subr.mxu0 0.0
    %349 = vmatpush1.msra.mxu0 0.0
    %350 = vmatprep.subr.mxu0 0.0
    %351 = vmatpush1.msra.mxu0 0.0
    %352 = vmatprep.subr.mxu0 0.0
    %353 = vmatpush1.msra.mxu0 0.0
    %354 = vmatprep.subr.mxu0 0.0
    %355 = vmatpush1.msra.mxu0 0.0
    %356 = vmatprep.subr.mxu0 0.0
    %357 = vmatpush1.msra.mxu0 0.0
    %358 = vmatprep.mubr.f32.mxu0 0.0
    %359 = vmatmul.mubr.f32.gmra.mrb[0].mxu0 %v292
    %v360 = vpop.f32.mrb[0].mxu0
    %v361 = vadd.f32 0.0, %v360
    %v362 = vpop.f32.mrb[0].mxu0
    %363 = vdwg.mxu0
    %v364 = vadd.f32 %v291, %v361
    %v365 = vxor.u32 %v364, 2147483648
    %v366 = vmul.f32 %v365, 1.442695
    %v367 = vpow.pop %v366
    %v368 = vadd.f32 %v367, 1.0
    %v369 = vrcp.pop %v368
    %v370 = vmul.f32 1.0, %v369
    %v371 = vtanh.pop %v364
    %v372 = vsel %vm266, %v371, %v370
    %v373 = vmul.f32 %v372, %v278
    %375 = vrot.lane.b32.xlu0 %v372, 64
    %v376 = vpop.permute.xlu0 %375
    %v378 = vmul.f32 %v372, %v376
    %380 = vrot.lane.b32.xlu0 %v378, 32
    %v381 = vpop.permute.xlu0 %380
    %v383 = vadd.f32 %v373, %v381
    %v384 = vtanh.pop %v383
    %386 = vrot.lane.b32.xlu0 %v384, 64
    %v387 = vpop.permute.xlu0 %386
    %v389 = vmul.f32 %v372, %v387
    %391 = vrot.lane.b32.xlu0 %v389, 32
    %v392 = vpop.permute.xlu0 %391
    %394 = vst.msk [vmem:[#allocation3 + $0x4] sm:$0xf] %vm289, %v392
    %v395 = vld [vmem:[#allocation2 + $0x8] sm:$0xf]
    %v396 = vsel %vm183, %v392, 0
    %398 = vmatprep.subr.mxu0 0.0
    %399 = vmatpush1.msra.mxu0 %v178
    %400 = vmatprep.subr.mxu0 0.0
    %401 = vmatpush1.msra.mxu0 %v179
    %402 = vmatprep.subr.mxu0 0.0
    %403 = vmatpush1.msra.mxu0 %v180
    %404 = vmatprep.subr.mxu0 0.0
    %405 = vmatpush1.msra.mxu0 %v181
    %406 = vmatprep.subr.mxu0 0.0
    %407 = vmatpush1.msra.mxu0 0.0
    %408 = vmatprep.subr.mxu0 0.0
    %409 = vmatpush1.msra.mxu0 0.0
    %410 = vmatprep.subr.mxu0 0.0
    %411 = vmatpush1.msra.mxu0 0.0
    %412 = vmatprep.subr.mxu0 0.0
    %413 = vmatpush1.msra.mxu0 0.0
    %414 = vmatprep.subr.mxu0 0.0
    %415 = vmatpush1.msra.mxu0 0.0
    %416 = vmatprep.subr.mxu0 0.0
    %417 = vmatpush1.msra.mxu0 0.0
    %418 = vmatprep.subr.mxu0 0.0
    %419 = vmatpush1.msra.mxu0 0.0
    %420 = vmatprep.subr.mxu0 0.0
    %421 = vmatpush1.msra.mxu0 0.0
    %422 = vmatprep.subr.mxu0 0.0
    %423 = vmatpush1.msra.mxu0 0.0
    %424 = vmatprep.subr.mxu0 0.0
    %425 = vmatpush1.msra.mxu0 0.0
    %426 = vmatprep.subr.mxu0 0.0
    %427 = vmatpush1.msra.mxu0 0.0
    %428 = vmatprep.subr.mxu0 0.0
    %429 = vmatpush1.msra.mxu0 0.0
    %430 = vmatprep.subr.mxu0 0.0
    %431 = vmatpush1.msra.mxu0 0.0
    %432 = vmatprep.subr.mxu0 0.0
    %433 = vmatpush1.msra.mxu0 0.0
    %434 = vmatprep.subr.mxu0 0.0
    %435 = vmatpush1.msra.mxu0 0.0
    %436 = vmatprep.subr.mxu0 0.0
    %437 = vmatpush1.msra.mxu0 0.0
    %438 = vmatprep.subr.mxu0 0.0
    %439 = vmatpush1.msra.mxu0 0.0
    %440 = vmatprep.subr.mxu0 0.0
    %441 = vmatpush1.msra.mxu0 0.0
    %442 = vmatprep.subr.mxu0 0.0
    %443 = vmatpush1.msra.mxu0 0.0
    %444 = vmatprep.subr.mxu0 0.0
    %445 = vmatpush1.msra.mxu0 0.0
    %446 = vmatprep.subr.mxu0 0.0
    %447 = vmatpush1.msra.mxu0 0.0
    %448 = vmatprep.subr.mxu0 0.0
    %449 = vmatpush1.msra.mxu0 0.0
    %450 = vmatprep.subr.mxu0 0.0
    %451 = vmatpush1.msra.mxu0 0.0
    %452 = vmatprep.subr.mxu0 0.0
    %453 = vmatpush1.msra.mxu0 0.0
    %454 = vmatprep.subr.mxu0 0.0
    %455 = vmatpush1.msra.mxu0 0.0
    %456 = vmatprep.subr.mxu0 0.0
    %457 = vmatpush1.msra.mxu0 0.0
    %458 = vmatprep.subr.mxu0 0.0
    %459 = vmatpush1.msra.mxu0 0.0
    %460 = vmatprep.subr.mxu0 0.0
    %461 = vmatpush1.msra.mxu0 0.0
    %462 = vmatprep.mubr.f32.mxu0 0.0
    %463 = vmatmul.mubr.f32.gmra.mrb[0].mxu0 %v396
    %v464 = vpop.f32.mrb[0].mxu0
    %v465 = vadd.f32 0.0, %v464
    %v466 = vpop.f32.mrb[0].mxu0
    %467 = vdwg.mxu0
    %v468 = vadd.f32 %v395, %v465
    %v469 = vxor.u32 %v468, 2147483648
    %v470 = vmul.f32 %v469, 1.442695
    %v471 = vpow.pop %v470
    %v472 = vadd.f32 %v471, 1.0
    %v473 = vrcp.pop %v472
    %v474 = vmul.f32 1.0, %v473
    %v475 = vtanh.pop %v468
    %v476 = vsel %vm266, %v475, %v474
    %v477 = vmul.f32 %v476, %v383
    %479 = vrot.lane.b32.xlu0 %v476, 64
    %v480 = vpop.permute.xlu0 %479
    %v482 = vmul.f32 %v476, %v480
    %484 = vrot.lane.b32.xlu0 %v482, 32
    %v485 = vpop.permute.xlu0 %484
    %v487 = vadd.f32 %v477, %v485
    %v488 = vtanh.pop %v487
    %490 = vrot.lane.b32.xlu0 %v488, 64
    %v491 = vpop.permute.xlu0 %490
    %v493 = vmul.f32 %v476, %v491
    %495 = vrot.lane.b32.xlu0 %v493, 32
    %v496 = vpop.permute.xlu0 %495
    %498 = vst.msk [vmem:[#allocation3 + $0x8] sm:$0xf] %vm289, %v496
    %v499 = vld [vmem:[#allocation2 + $0xc] sm:$0xf]
    %v500 = vsel %vm183, %v496, 0
    %502 = vmatprep.subr.mxu0 0.0
    %503 = vmatpush1.msra.mxu0 %v178
    %504 = vmatprep.subr.mxu0 0.0
    %505 = vmatpush1.msra.mxu0 %v179
    %506 = vmatprep.subr.mxu0 0.0
    %507 = vmatpush1.msra.mxu0 %v180
    %508 = vmatprep.subr.mxu0 0.0
    %509 = vmatpush1.msra.mxu0 %v181
    %510 = vmatprep.subr.mxu0 0.0
    %511 = vmatpush1.msra.mxu0 0.0
    %512 = vmatprep.subr.mxu0 0.0
    %513 = vmatpush1.msra.mxu0 0.0
    %514 = vmatprep.subr.mxu0 0.0
    %515 = vmatpush1.msra.mxu0 0.0
    %516 = vmatprep.subr.mxu0 0.0
    %517 = vmatpush1.msra.mxu0 0.0
    %518 = vmatprep.subr.mxu0 0.0
    %519 = vmatpush1.msra.mxu0 0.0
    %520 = vmatprep.subr.mxu0 0.0
    %521 = vmatpush1.msra.mxu0 0.0
    %522 = vmatprep.subr.mxu0 0.0
    %523 = vmatpush1.msra.mxu0 0.0
    %524 = vmatprep.subr.mxu0 0.0
    %525 = vmatpush1.msra.mxu0 0.0
    %526 = vmatprep.subr.mxu0 0.0
    %527 = vmatpush1.msra.mxu0 0.0
    %528 = vmatprep.subr.mxu0 0.0
    %529 = vmatpush1.msra.mxu0 0.0
    %530 = vmatprep.subr.mxu0 0.0
    %531 = vmatpush1.msra.mxu0 0.0
    %532 = vmatprep.subr.mxu0 0.0
    %533 = vmatpush1.msra.mxu0 0.0
    %534 = vmatprep.subr.mxu0 0.0
    %535 = vmatpush1.msra.mxu0 0.0
    %536 = vmatprep.subr.mxu0 0.0
    %537 = vmatpush1.msra.mxu0 0.0
    %538 = vmatprep.subr.mxu0 0.0
    %539 = vmatpush1.msra.mxu0 0.0
    %540 = vmatprep.subr.mxu0 0.0
    %541 = vmatpush1.msra.mxu0 0.0
    %542 = vmatprep.subr.mxu0 0.0
    %543 = vmatpush1.msra.mxu0 0.0
    %544 = vmatprep.subr.mxu0 0.0
    %545 = vmatpush1.msra.mxu0 0.0
    %546 = vmatprep.subr.mxu0 0.0
    %547 = vmatpush1.msra.mxu0 0.0
    %548 = vmatprep.subr.mxu0 0.0
    %549 = vmatpush1.msra.mxu0 0.0
    %550 = vmatprep.subr.mxu0 0.0
    %551 = vmatpush1.msra.mxu0 0.0
    %552 = vmatprep.subr.mxu0 0.0
    %553 = vmatpush1.msra.mxu0 0.0
    %554 = vmatprep.subr.mxu0 0.0
    %555 = vmatpush1.msra.mxu0 0.0
    %556 = vmatprep.subr.mxu0 0.0
    %557 = vmatpush1.msra.mxu0 0.0
    %558 = vmatprep.subr.mxu0 0.0
    %559 = vmatpush1.msra.mxu0 0.0
    %560 = vmatprep.subr.mxu0 0.0
    %561 = vmatpush1.msra.mxu0 0.0
    %562 = vmatprep.subr.mxu0 0.0
    %563 = vmatpush1.msra.mxu0 0.0
    %564 = vmatprep.subr.mxu0 0.0
    %565 = vmatpush1.msra.mxu0 0.0
    %566 = vmatprep.mubr.f32.mxu0 0.0
    %567 = vmatmul.mubr.f32.gmra.mrb[0].mxu0 %v500
    %v568 = vpop.f32.mrb[0].mxu0
    %v569 = vadd.f32 0.0, %v568
    %v570 = vpop.f32.mrb[0].mxu0
    %571 = vdwg.mxu0
    %v572 = vadd.f32 %v499, %v569
    %v573 = vxor.u32 %v572, 2147483648
    %v574 = vmul.f32 %v573, 1.442695
    %v575 = vpow.pop %v574
    %v576 = vadd.f32 %v575, 1.0
    %v577 = vrcp.pop %v576
    %v578 = vmul.f32 1.0, %v577
    %v579 = vtanh.pop %v572
    %v580 = vsel %vm266, %v579, %v578
    %v581 = vmul.f32 %v580, %v487
    %583 = vrot.lane.b32.xlu0 %v580, 64
    %v584 = vpop.permute.xlu0 %583
    %v586 = vmul.f32 %v580, %v584
    %588 = vrot.lane.b32.xlu0 %v586, 32
    %v589 = vpop.permute.xlu0 %588
    %v591 = vadd.f32 %v581, %v589
    %v592 = vtanh.pop %v591
    %594 = vrot.lane.b32.xlu0 %v592, 64
    %v595 = vpop.permute.xlu0 %594
    %v597 = vmul.f32 %v580, %v595
    %599 = vrot.lane.b32.xlu0 %v597, 32
    %v600 = vpop.permute.xlu0 %599
    %602 = vst.msk [vmem:[#allocation3 + $0xc] sm:$0xf] %vm289, %v600
    %v603 = vld [vmem:[#allocation2 + $0x10] sm:$0xf]
    %v604 = vsel %vm183, %v600, 0
    %606 = vmatprep.subr.mxu0 0.0
    %607 = vmatpush1.msra.mxu0 %v178
    %608 = vmatprep.subr.mxu0 0.0
    %609 = vmatpush1.msra.mxu0 %v179
    %610 = vmatprep.subr.mxu0 0.0
    %611 = vmatpush1.msra.mxu0 %v180
    %612 = vmatprep.subr.mxu0 0.0
    %613 = vmatpush1.msra.mxu0 %v181
    %614 = vmatprep.subr.mxu0 0.0
    %615 = vmatpush1.msra.mxu0 0.0
    %616 = vmatprep.subr.mxu0 0.0
    %617 = vmatpush1.msra.mxu0 0.0
    %618 = vmatprep.subr.mxu0 0.0
    %619 = vmatpush1.msra.mxu0 0.0
    %620 = vmatprep.subr.mxu0 0.0
    %621 = vmatpush1.msra.mxu0 0.0
    %622 = vmatprep.subr.mxu0 0.0
    %623 = vmatpush1.msra.mxu0 0.0
    %624 = vmatprep.subr.mxu0 0.0
    %625 = vmatpush1.msra.mxu0 0.0
    %626 = vmatprep.subr.mxu0 0.0
    %627 = vmatpush1.msra.mxu0 0.0
    %628 = vmatprep.subr.mxu0 0.0
    %629 = vmatpush1.msra.mxu0 0.0
    %630 = vmatprep.subr.mxu0 0.0
    %631 = vmatpush1.msra.mxu0 0.0
    %632 = vmatprep.subr.mxu0 0.0
    %633 = vmatpush1.msra.mxu0 0.0
    %634 = vmatprep.subr.mxu0 0.0
    %635 = vmatpush1.msra.mxu0 0.0
    %636 = vmatprep.subr.mxu0 0.0
    %637 = vmatpush1.msra.mxu0 0.0
    %638 = vmatprep.subr.mxu0 0.0
    %639 = vmatpush1.msra.mxu0 0.0
    %640 = vmatprep.subr.mxu0 0.0
    %641 = vmatpush1.msra.mxu0 0.0
    %642 = vmatprep.subr.mxu0 0.0
    %643 = vmatpush1.msra.mxu0 0.0
    %644 = vmatprep.subr.mxu0 0.0
    %645 = vmatpush1.msra.mxu0 0.0
    %646 = vmatprep.subr.mxu0 0.0
    %647 = vmatpush1.msra.mxu0 0.0
    %648 = vmatprep.subr.mxu0 0.0
    %649 = vmatpush1.msra.mxu0 0.0
    %650 = vmatprep.subr.mxu0 0.0
    %651 = vmatpush1.msra.mxu0 0.0
    %652 = vmatprep.subr.mxu0 0.0
    %653 = vmatpush1.msra.mxu0 0.0
    %654 = vmatprep.subr.mxu0 0.0
    %655 = vmatpush1.msra.mxu0 0.0
    %656 = vmatprep.subr.mxu0 0.0
    %657 = vmatpush1.msra.mxu0 0.0
    %658 = vmatprep.subr.mxu0 0.0
    %659 = vmatpush1.msra.mxu0 0.0
    %660 = vmatprep.subr.mxu0 0.0
    %661 = vmatpush1.msra.mxu0 0.0
    %662 = vmatprep.subr.mxu0 0.0
    %663 = vmatpush1.msra.mxu0 0.0
    %664 = vmatprep.subr.mxu0 0.0
    %665 = vmatpush1.msra.mxu0 0.0
    %666 = vmatprep.subr.mxu0 0.0
    %667 = vmatpush1.msra.mxu0 0.0
    %668 = vmatprep.subr.mxu0 0.0
    %669 = vmatpush1.msra.mxu0 0.0
    %670 = vmatprep.mubr.f32.mxu0 0.0
    %671 = vmatmul.mubr.f32.gmra.mrb[0].mxu0 %v604
    %v672 = vpop.f32.mrb[0].mxu0
    %v673 = vadd.f32 0.0, %v672
    %v674 = vpop.f32.mrb[0].mxu0
    %675 = vdwg.mxu0
    %v676 = vadd.f32 %v603, %v673
    %v677 = vxor.u32 %v676, 2147483648
    %v678 = vmul.f32 %v677, 1.442695
    %v679 = vpow.pop %v678
    %v680 = vadd.f32 %v679, 1.0
    %v681 = vrcp.pop %v680
    %v682 = vmul.f32 1.0, %v681
    %v683 = vtanh.pop %v676
    %v684 = vsel %vm266, %v683, %v682
    %v685 = vmul.f32 %v684, %v591
    %687 = vrot.lane.b32.xlu0 %v684, 64
    %v688 = vpop.permute.xlu0 %687
    %v690 = vmul.f32 %v684, %v688
    %692 = vrot.lane.b32.xlu0 %v690, 32
    %v693 = vpop.permute.xlu0 %692
    %v695 = vadd.f32 %v685, %v693
    %v696 = vtanh.pop %v695
    %698 = vrot.lane.b32.xlu0 %v696, 64
    %v699 = vpop.permute.xlu0 %698
    %v701 = vmul.f32 %v684, %v699
    %703 = vrot.lane.b32.xlu0 %v701, 32
    %v704 = vpop.permute.xlu0 %703
    %706 = vst.msk [vmem:[#allocation3 + $0x10] sm:$0xf] %vm289, %v704
    %v707 = vld [vmem:[#allocation2 + $0x14] sm:$0xf]
    %v708 = vsel %vm183, %v704, 0
    %710 = vmatprep.subr.mxu0 0.0
    %711 = vmatpush1.msra.mxu0 %v178
    %712 = vmatprep.subr.mxu0 0.0
    %713 = vmatpush1.msra.mxu0 %v179
    %714 = vmatprep.subr.mxu0 0.0
    %715 = vmatpush1.msra.mxu0 %v180
    %716 = vmatprep.subr.mxu0 0.0
    %717 = vmatpush1.msra.mxu0 %v181
    %718 = vmatprep.subr.mxu0 0.0
    %719 = vmatpush1.msra.mxu0 0.0
    %720 = vmatprep.subr.mxu0 0.0
    %721 = vmatpush1.msra.mxu0 0.0
    %722 = vmatprep.subr.mxu0 0.0
    %723 = vmatpush1.msra.mxu0 0.0
    %724 = vmatprep.subr.mxu0 0.0
    %725 = vmatpush1.msra.mxu0 0.0
    %726 = vmatprep.subr.mxu0 0.0
    %727 = vmatpush1.msra.mxu0 0.0
    %728 = vmatprep.subr.mxu0 0.0
    %729 = vmatpush1.msra.mxu0 0.0
    %730 = vmatprep.subr.mxu0 0.0
    %731 = vmatpush1.msra.mxu0 0.0
    %732 = vmatprep.subr.mxu0 0.0
    %733 = vmatpush1.msra.mxu0 0.0
    %734 = vmatprep.subr.mxu0 0.0
    %735 = vmatpush1.msra.mxu0 0.0
    %736 = vmatprep.subr.mxu0 0.0
    %737 = vmatpush1.msra.mxu0 0.0
    %738 = vmatprep.subr.mxu0 0.0
    %739 = vmatpush1.msra.mxu0 0.0
    %740 = vmatprep.subr.mxu0 0.0
    %741 = vmatpush1.msra.mxu0 0.0
    %742 = vmatprep.subr.mxu0 0.0
    %743 = vmatpush1.msra.mxu0 0.0
    %744 = vmatprep.subr.mxu0 0.0
    %745 = vmatpush1.msra.mxu0 0.0
    %746 = vmatprep.subr.mxu0 0.0
    %747 = vmatpush1.msra.mxu0 0.0
    %748 = vmatprep.subr.mxu0 0.0
    %749 = vmatpush1.msra.mxu0 0.0
    %750 = vmatprep.subr.mxu0 0.0
    %751 = vmatpush1.msra.mxu0 0.0
    %752 = vmatprep.subr.mxu0 0.0
    %753 = vmatpush1.msra.mxu0 0.0
    %754 = vmatprep.subr.mxu0 0.0
    %755 = vmatpush1.msra.mxu0 0.0
    %756 = vmatprep.subr.mxu0 0.0
    %757 = vmatpush1.msra.mxu0 0.0
    %758 = vmatprep.subr.mxu0 0.0
    %759 = vmatpush1.msra.mxu0 0.0
    %760 = vmatprep.subr.mxu0 0.0
    %761 = vmatpush1.msra.mxu0 0.0
    %762 = vmatprep.subr.mxu0 0.0
    %763 = vmatpush1.msra.mxu0 0.0
    %764 = vmatprep.subr.mxu0 0.0
    %765 = vmatpush1.msra.mxu0 0.0
    %766 = vmatprep.subr.mxu0 0.0
    %767 = vmatpush1.msra.mxu0 0.0
    %768 = vmatprep.subr.mxu0 0.0
    %769 = vmatpush1.msra.mxu0 0.0
    %770 = vmatprep.subr.mxu0 0.0
    %771 = vmatpush1.msra.mxu0 0.0
    %772 = vmatprep.subr.mxu0 0.0
    %773 = vmatpush1.msra.mxu0 0.0
    %774 = vmatprep.mubr.f32.mxu0 0.0
    %775 = vmatmul.mubr.f32.gmra.mrb[0].mxu0 %v708
    %v776 = vpop.f32.mrb[0].mxu0
    %v777 = vadd.f32 0.0, %v776
    %v778 = vpop.f32.mrb[0].mxu0
    %779 = vdwg.mxu0
    %v780 = vadd.f32 %v707, %v777
    %v781 = vxor.u32 %v780, 2147483648
    %v782 = vmul.f32 %v781, 1.442695
    %v783 = vpow.pop %v782
    %v784 = vadd.f32 %v783, 1.0
    %v785 = vrcp.pop %v784
    %v786 = vmul.f32 1.0, %v785
    %v787 = vtanh.pop %v780
    %v788 = vsel %vm266, %v787, %v786
    %v789 = vmul.f32 %v788, %v695
    %791 = vrot.lane.b32.xlu0 %v788, 64
    %v792 = vpop.permute.xlu0 %791
    %v794 = vmul.f32 %v788, %v792
    %796 = vrot.lane.b32.xlu0 %v794, 32
    %v797 = vpop.permute.xlu0 %796
    %v799 = vadd.f32 %v789, %v797
    %v800 = vtanh.pop %v799
    %802 = vrot.lane.b32.xlu0 %v800, 64
    %v803 = vpop.permute.xlu0 %802
    %v805 = vmul.f32 %v788, %v803
    %807 = vrot.lane.b32.xlu0 %v805, 32
    %v808 = vpop.permute.xlu0 %807
    %810 = vst.msk [vmem:[#allocation3 + $0x14] sm:$0xf] %vm289, %v808
    %v811 = vld [vmem:[#allocation2 + $0x18] sm:$0xf]
    %v812 = vsel %vm183, %v808, 0
    %814 = vmatprep.subr.mxu0 0.0
    %815 = vmatpush1.msra.mxu0 %v178
    %816 = vmatprep.subr.mxu0 0.0
    %817 = vmatpush1.msra.mxu0 %v179
    %818 = vmatprep.subr.mxu0 0.0
    %819 = vmatpush1.msra.mxu0 %v180
    %820 = vmatprep.subr.mxu0 0.0
    %821 = vmatpush1.msra.mxu0 %v181
    %822 = vmatprep.subr.mxu0 0.0
    %823 = vmatpush1.msra.mxu0 0.0
    %824 = vmatprep.subr.mxu0 0.0
    %825 = vmatpush1.msra.mxu0 0.0
    %826 = vmatprep.subr.mxu0 0.0
    %827 = vmatpush1.msra.mxu0 0.0
    %828 = vmatprep.subr.mxu0 0.0
    %829 = vmatpush1.msra.mxu0 0.0
    %830 = vmatprep.subr.mxu0 0.0
    %831 = vmatpush1.msra.mxu0 0.0
    %832 = vmatprep.subr.mxu0 0.0
    %833 = vmatpush1.msra.mxu0 0.0
    %834 = vmatprep.subr.mxu0 0.0
    %835 = vmatpush1.msra.mxu0 0.0
    %836 = vmatprep.subr.mxu0 0.0
    %837 = vmatpush1.msra.mxu0 0.0
    %838 = vmatprep.subr.mxu0 0.0
    %839 = vmatpush1.msra.mxu0 0.0
    %840 = vmatprep.subr.mxu0 0.0
    %841 = vmatpush1.msra.mxu0 0.0
    %842 = vmatprep.subr.mxu0 0.0
    %843 = vmatpush1.msra.mxu0 0.0
    %844 = vmatprep.subr.mxu0 0.0
    %845 = vmatpush1.msra.mxu0 0.0
    %846 = vmatprep.subr.mxu0 0.0
    %847 = vmatpush1.msra.mxu0 0.0
    %848 = vmatprep.subr.mxu0 0.0
    %849 = vmatpush1.msra.mxu0 0.0
    %850 = vmatprep.subr.mxu0 0.0
    %851 = vmatpush1.msra.mxu0 0.0
    %852 = vmatprep.subr.mxu0 0.0
    %853 = vmatpush1.msra.mxu0 0.0
    %854 = vmatprep.subr.mxu0 0.0
    %855 = vmatpush1.msra.mxu0 0.0
    %856 = vmatprep.subr.mxu0 0.0
    %857 = vmatpush1.msra.mxu0 0.0
    %858 = vmatprep.subr.mxu0 0.0
    %859 = vmatpush1.msra.mxu0 0.0
    %860 = vmatprep.subr.mxu0 0.0
    %861 = vmatpush1.msra.mxu0 0.0
    %862 = vmatprep.subr.mxu0 0.0
    %863 = vmatpush1.msra.mxu0 0.0
    %864 = vmatprep.subr.mxu0 0.0
    %865 = vmatpush1.msra.mxu0 0.0
    %866 = vmatprep.subr.mxu0 0.0
    %867 = vmatpush1.msra.mxu0 0.0
    %868 = vmatprep.subr.mxu0 0.0
    %869 = vmatpush1.msra.mxu0 0.0
    %870 = vmatprep.subr.mxu0 0.0
    %871 = vmatpush1.msra.mxu0 0.0
    %872 = vmatprep.subr.mxu0 0.0
    %873 = vmatpush1.msra.mxu0 0.0
    %874 = vmatprep.subr.mxu0 0.0
    %875 = vmatpush1.msra.mxu0 0.0
    %876 = vmatprep.subr.mxu0 0.0
    %877 = vmatpush1.msra.mxu0 0.0
    %878 = vmatprep.mubr.f32.mxu0 0.0
    %879 = vmatmul.mubr.f32.gmra.mrb[0].mxu0 %v812
    %v880 = vpop.f32.mrb[0].mxu0
    %v881 = vadd.f32 0.0, %v880
    %v882 = vpop.f32.mrb[0].mxu0
    %883 = vdwg.mxu0
    %v884 = vadd.f32 %v811, %v881
    %v885 = vxor.u32 %v884, 2147483648
    %v886 = vmul.f32 %v885, 1.442695
    %v887 = vpow.pop %v886
    %v888 = vadd.f32 %v887, 1.0
    %v889 = vrcp.pop %v888
    %v890 = vmul.f32 1.0, %v889
    %v891 = vtanh.pop %v884
    %v892 = vsel %vm266, %v891, %v890
    %v893 = vmul.f32 %v892, %v799
    %895 = vrot.lane.b32.xlu0 %v892, 64
    %v896 = vpop.permute.xlu0 %895
    %v898 = vmul.f32 %v892, %v896
    %900 = vrot.lane.b32.xlu0 %v898, 32
    %v901 = vpop.permute.xlu0 %900
    %v903 = vadd.f32 %v893, %v901
    %v904 = vtanh.pop %v903
    %906 = vrot.lane.b32.xlu0 %v904, 64
    %v907 = vpop.permute.xlu0 %906
    %v909 = vmul.f32 %v892, %v907
    %911 = vrot.lane.b32.xlu0 %v909, 32
    %v912 = vpop.permute.xlu0 %911
    %914 = vst.msk [vmem:[#allocation3 + $0x18] sm:$0xf] %vm289, %v912
    %v915 = vld [vmem:[#allocation2 + $0x1c] sm:$0xf]
    %v916 = vsel %vm183, %v912, 0
    %918 = vmatprep.subr.mxu0 0.0
    %919 = vmatpush1.msra.mxu0 %v178
    %920 = vmatprep.subr.mxu0 0.0
    %921 = vmatpush1.msra.mxu0 %v179
    %922 = vmatprep.subr.mxu0 0.0
    %923 = vmatpush1.msra.mxu0 %v180
    %924 = vmatprep.subr.mxu0 0.0
    %925 = vmatpush1.msra.mxu0 %v181
    %926 = vmatprep.subr.mxu0 0.0
    %927 = vmatpush1.msra.mxu0 0.0
    %928 = vmatprep.subr.mxu0 0.0
    %929 = vmatpush1.msra.mxu0 0.0
    %930 = vmatprep.subr.mxu0 0.0
    %931 = vmatpush1.msra.mxu0 0.0
    %932 = vmatprep.subr.mxu0 0.0
    %933 = vmatpush1.msra.mxu0 0.0
    %934 = vmatprep.subr.mxu0 0.0
    %935 = vmatpush1.msra.mxu0 0.0
    %936 = vmatprep.subr.mxu0 0.0
    %937 = vmatpush1.msra.mxu0 0.0
    %938 = vmatprep.subr.mxu0 0.0
    %939 = vmatpush1.msra.mxu0 0.0
    %940 = vmatprep.subr.mxu0 0.0
    %941 = vmatpush1.msra.mxu0 0.0
    %942 = vmatprep.subr.mxu0 0.0
    %943 = vmatpush1.msra.mxu0 0.0
    %944 = vmatprep.subr.mxu0 0.0
    %945 = vmatpush1.msra.mxu0 0.0
    %946 = vmatprep.subr.mxu0 0.0
    %947 = vmatpush1.msra.mxu0 0.0
    %948 = vmatprep.subr.mxu0 0.0
    %949 = vmatpush1.msra.mxu0 0.0
    %950 = vmatprep.subr.mxu0 0.0
    %951 = vmatpush1.msra.mxu0 0.0
    %952 = vmatprep.subr.mxu0 0.0
    %953 = vmatpush1.msra.mxu0 0.0
    %954 = vmatprep.subr.mxu0 0.0
    %955 = vmatpush1.msra.mxu0 0.0
    %956 = vmatprep.subr.mxu0 0.0
    %957 = vmatpush1.msra.mxu0 0.0
    %958 = vmatprep.subr.mxu0 0.0
    %959 = vmatpush1.msra.mxu0 0.0
    %960 = vmatprep.subr.mxu0 0.0
    %961 = vmatpush1.msra.mxu0 0.0
    %962 = vmatprep.subr.mxu0 0.0
    %963 = vmatpush1.msra.mxu0 0.0
    %964 = vmatprep.subr.mxu0 0.0
    %965 = vmatpush1.msra.mxu0 0.0
    %966 = vmatprep.subr.mxu0 0.0
    %967 = vmatpush1.msra.mxu0 0.0
    %968 = vmatprep.subr.mxu0 0.0
    %969 = vmatpush1.msra.mxu0 0.0
    %970 = vmatprep.subr.mxu0 0.0
    %971 = vmatpush1.msra.mxu0 0.0
    %972 = vmatprep.subr.mxu0 0.0
    %973 = vmatpush1.msra.mxu0 0.0
    %974 = vmatprep.subr.mxu0 0.0
    %975 = vmatpush1.msra.mxu0 0.0
    %976 = vmatprep.subr.mxu0 0.0
    %977 = vmatpush1.msra.mxu0 0.0
    %978 = vmatprep.subr.mxu0 0.0
    %979 = vmatpush1.msra.mxu0 0.0
    %980 = vmatprep.subr.mxu0 0.0
    %981 = vmatpush1.msra.mxu0 0.0
    %982 = vmatprep.mubr.f32.mxu0 0.0
    %983 = vmatmul.mubr.f32.gmra.mrb[0].mxu0 %v916
    %v984 = vpop.f32.mrb[0].mxu0
    %v985 = vadd.f32 0.0, %v984
    %v986 = vpop.f32.mrb[0].mxu0
    %987 = vdwg.mxu0
    %v988 = vadd.f32 %v915, %v985
    %v989 = vxor.u32 %v988, 2147483648
    %v990 = vmul.f32 %v989, 1.442695
    %v991 = vpow.pop %v990
    %v992 = vadd.f32 %v991, 1.0
    %v993 = vrcp.pop %v992
    %v994 = vmul.f32 1.0, %v993
    %v995 = vtanh.pop %v988
    %v996 = vsel %vm266, %v995, %v994
    %v997 = vmul.f32 %v996, %v903
    %999 = vrot.lane.b32.xlu0 %v996, 64
    %v1000 = vpop.permute.xlu0 %999
    %v1002 = vmul.f32 %v996, %v1000
    %1004 = vrot.lane.b32.xlu0 %v1002, 32
    %v1005 = vpop.permute.xlu0 %1004
    %v1007 = vadd.f32 %v997, %v1005
    %v1008 = vtanh.pop %v1007
    %1010 = vrot.lane.b32.xlu0 %v1008, 64
    %v1011 = vpop.permute.xlu0 %1010
    %v1013 = vmul.f32 %v996, %v1011
    %1015 = vrot.lane.b32.xlu0 %v1013, 32
    %v1016 = vpop.permute.xlu0 %1015
    %1018 = vst.msk [vmem:[#allocation3 + $0x1c] sm:$0xf] %vm289, %v1016
    %1019 = vst.msk [vmem:[#allocation9] sm:$0xf] %vm289, %v1016
    %1021 = vrot.lane.b32.xlu0 %v1007, 96
    %v1022 = vpop.permute.xlu0 %1021
    %1024 = vst.msk [vmem:[#allocation10] sm:$0xf] %vm289, %v1022
    %v1025 = vld [vmem:[#allocation3] sm:$0xff]
    %v1026 = vld [vmem:[#allocation3 + $0x8] sm:$0xff]
    %v1027 = vld [vmem:[#allocation3 + $0x10] sm:$0xff]
    %v1028 = vld [vmem:[#allocation3 + $0x18] sm:$0xff]
    %v1029 = vld [vmem:[%s4] sm:$0xff]
    %v1030 = vld [vmem:[%s4 + $0x8] sm:$0xff]
    %v1031 = vld [vmem:[%s4 + $0x10] sm:$0xff]
    %v1032 = vld [vmem:[%s4 + $0x18] sm:$0xff]
    %v1033 = vld [vmem:[%s6] sm:$0x1]
    %v1035 = vlaneseq
    %v1036 = vshrl.u32 %v1035, 7
    %v1037 = vsub.s32 0, %v1036
    %v1038 = vrot.slane %v1033, %v1037
    %v1041 = vsel %vm183, %v1025, 0
    %v1044 = vsel %vm183, %v1026, 0
    %v1047 = vsel %vm183, %v1027, 0
    %v1050 = vsel %vm183, %v1028, 0
    %1052 = vmatprep.subr.mxu0 0.0
    %1053 = vmatpush1.msra.mxu0 %v1029
    %1054 = vmatprep.subr.mxu0 0.0
    %1055 = vmatpush1.msra.mxu0 %v1030
    %1056 = vmatprep.subr.mxu0 0.0
    %1057 = vmatpush1.msra.mxu0 %v1031
    %1058 = vmatprep.subr.mxu0 0.0
    %1059 = vmatpush1.msra.mxu0 %v1032
    %1060 = vmatprep.subr.mxu0 0.0
    %1061 = vmatpush1.msra.mxu0 0.0
    %1062 = vmatprep.subr.mxu0 0.0
    %1063 = vmatpush1.msra.mxu0 0.0
    %1064 = vmatprep.subr.mxu0 0.0
    %1065 = vmatpush1.msra.mxu0 0.0
    %1066 = vmatprep.subr.mxu0 0.0
    %1067 = vmatpush1.msra.mxu0 0.0
    %1068 = vmatprep.subr.mxu0 0.0
    %1069 = vmatpush1.msra.mxu0 0.0
    %1070 = vmatprep.subr.mxu0 0.0
    %1071 = vmatpush1.msra.mxu0 0.0
    %1072 = vmatprep.subr.mxu0 0.0
    %1073 = vmatpush1.msra.mxu0 0.0
    %1074 = vmatprep.subr.mxu0 0.0
    %1075 = vmatpush1.msra.mxu0 0.0
    %1076 = vmatprep.subr.mxu0 0.0
    %1077 = vmatpush1.msra.mxu0 0.0
    %1078 = vmatprep.subr.mxu0 0.0
    %1079 = vmatpush1.msra.mxu0 0.0
    %1080 = vmatprep.subr.mxu0 0.0
    %1081 = vmatpush1.msra.mxu0 0.0
    %1082 = vmatprep.subr.mxu0 0.0
    %1083 = vmatpush1.msra.mxu0 0.0
    %1084 = vmatprep.subr.mxu0 0.0
    %1085 = vmatpush1.msra.mxu0 0.0
    %1086 = vmatprep.subr.mxu0 0.0
    %1087 = vmatpush1.msra.mxu0 0.0
    %1088 = vmatprep.subr.mxu0 0.0
    %1089 = vmatpush1.msra.mxu0 0.0
    %1090 = vmatprep.subr.mxu0 0.0
    %1091 = vmatpush1.msra.mxu0 0.0
    %1092 = vmatprep.subr.mxu0 0.0
    %1093 = vmatpush1.msra.mxu0 0.0
    %1094 = vmatprep.subr.mxu0 0.0
    %1095 = vmatpush1.msra.mxu0 0.0
    %1096 = vmatprep.subr.mxu0 0.0
    %1097 = vmatpush1.msra.mxu0 0.0
    %1098 = vmatprep.subr.mxu0 0.0
    %1099 = vmatpush1.msra.mxu0 0.0
    %1100 = vmatprep.subr.mxu0 0.0
    %1101 = vmatpush1.msra.mxu0 0.0
    %1102 = vmatprep.subr.mxu0 0.0
    %1103 = vmatpush1.msra.mxu0 0.0
    %1104 = vmatprep.subr.mxu0 0.0
    %1105 = vmatpush1.msra.mxu0 0.0
    %1106 = vmatprep.subr.mxu0 0.0
    %1107 = vmatpush1.msra.mxu0 0.0
    %1108 = vmatprep.subr.mxu0 0.0
    %1109 = vmatpush1.msra.mxu0 0.0
    %1110 = vmatprep.subr.mxu0 0.0
    %1111 = vmatpush1.msra.mxu0 0.0
    %1112 = vmatprep.subr.mxu0 0.0
    %1113 = vmatpush1.msra.mxu0 0.0
    %1114 = vmatprep.subr.mxu0 0.0
    %1115 = vmatpush1.msra.mxu0 0.0
    %1116 = vmatprep.mubr.f32.mxu0 0.0
    %1117 = vmatmul.mubr.f32.gmra.mrb[0].mxu0 %v1041
    %v1118 = vpop.f32.mrb[0].mxu0
    %v1119 = vadd.f32 %v1038, %v1118
    %v1120 = vpop.f32.mrb[0].mxu0
    %1121 = vmatprep.mubr.f32.mxu0 0.0
    %1122 = vmatmul.mubr.f32.gmra.mrb[0].mxu0 %v1044
    %v1123 = vpop.f32.mrb[0].mxu0
    %v1124 = vadd.f32 %v1038, %v1123
    %v1125 = vpop.f32.mrb[0].mxu0
    %1126 = vmatprep.mubr.f32.mxu0 0.0
    %1127 = vmatmul.mubr.f32.gmra.mrb[0].mxu0 %v1047
    %v1128 = vpop.f32.mrb[0].mxu0
    %v1129 = vadd.f32 %v1038, %v1128
    %v1130 = vpop.f32.mrb[0].mxu0
    %1131 = vmatprep.mubr.f32.mxu0 0.0
    %1132 = vmatmul.mubr.f32.gmra.mrb[0].mxu0 %v1050
    %v1133 = vpop.f32.mrb[0].mxu0
    %v1134 = vadd.f32 %v1038, %v1133
    %v1135 = vpop.f32.mrb[0].mxu0
    %1136 = vdwg.mxu0
    %1137 = vst [vmem:[#allocation2] sm:$0xff] %v1119
    %1138 = vst [vmem:[#allocation2 + $0x8] sm:$0xff] %v1124
    %1139 = vst [vmem:[#allocation2 + $0x10] sm:$0xff] %v1129
    %1140 = vst [vmem:[#allocation2 + $0x18] sm:$0xff] %v1134
    %v1141 = vld [vmem:[#allocation7] sm:$0xff]
    %v1142 = vld [vmem:[#allocation7 + $0x8] sm:$0xff]
    %v1143 = vld [vmem:[#allocation7 + $0x10] sm:$0xff]
    %v1144 = vld [vmem:[#allocation7 + $0x18] sm:$0xff]
    %v1145 = vld [vmem:[#allocation2] sm:$0xf]
    %1146 = vmatprep.subr.mxu0 0.0
    %1147 = vmatpush1.msra.mxu0 %v1141
    %1148 = vmatprep.subr.mxu0 0.0
    %1149 = vmatpush1.msra.mxu0 %v1142
    %1150 = vmatprep.subr.mxu0 0.0
    %1151 = vmatpush1.msra.mxu0 %v1143
    %1152 = vmatprep.subr.mxu0 0.0
    %1153 = vmatpush1.msra.mxu0 %v1144
    %1154 = vmatprep.subr.mxu0 0.0
    %1155 = vmatpush1.msra.mxu0 0.0
    %1156 = vmatprep.subr.mxu0 0.0
    %1157 = vmatpush1.msra.mxu0 0.0
    %1158 = vmatprep.subr.mxu0 0.0
    %1159 = vmatpush1.msra.mxu0 0.0
    %1160 = vmatprep.subr.mxu0 0.0
    %1161 = vmatpush1.msra.mxu0 0.0
    %1162 = vmatprep.subr.mxu0 0.0
    %1163 = vmatpush1.msra.mxu0 0.0
    %1164 = vmatprep.subr.mxu0 0.0
    %1165 = vmatpush1.msra.mxu0 0.0
    %1166 = vmatprep.subr.mxu0 0.0
    %1167 = vmatpush1.msra.mxu0 0.0
    %1168 = vmatprep.subr.mxu0 0.0
    %1169 = vmatpush1.msra.mxu0 0.0
    %1170 = vmatprep.subr.mxu0 0.0
    %1171 = vmatpush1.msra.mxu0 0.0
    %1172 = vmatprep.subr.mxu0 0.0
    %1173 = vmatpush1.msra.mxu0 0.0
    %1174 = vmatprep.subr.mxu0 0.0
    %1175 = vmatpush1.msra.mxu0 0.0
    %1176 = vmatprep.subr.mxu0 0.0
    %1177 = vmatpush1.msra.mxu0 0.0
    %1178 = vmatprep.subr.mxu0 0.0
    %1179 = vmatpush1.msra.mxu0 0.0
    %1180 = vmatprep.subr.mxu0 0.0
    %1181 = vmatpush1.msra.mxu0 0.0
    %1182 = vmatprep.subr.mxu0 0.0
    %1183 = vmatpush1.msra.mxu0 0.0
    %1184 = vmatprep.subr.mxu0 0.0
    %1185 = vmatpush1.msra.mxu0 0.0
    %1186 = vmatprep.subr.mxu0 0.0
    %1187 = vmatpush1.msra.mxu0 0.0
    %1188 = vmatprep.subr.mxu0 0.0
    %1189 = vmatpush1.msra.mxu0 0.0
    %1190 = vmatprep.subr.mxu0 0.0
    %1191 = vmatpush1.msra.mxu0 0.0
    %1192 = vmatprep.subr.mxu0 0.0
    %1193 = vmatpush1.msra.mxu0 0.0
    %1194 = vmatprep.subr.mxu0 0.0
    %1195 = vmatpush1.msra.mxu0 0.0
    %1196 = vmatprep.subr.mxu0 0.0
    %1197 = vmatpush1.msra.mxu0 0.0
    %1198 = vmatprep.subr.mxu0 0.0
    %1199 = vmatpush1.msra.mxu0 0.0
    %1200 = vmatprep.subr.mxu0 0.0
    %1201 = vmatpush1.msra.mxu0 0.0
    %1202 = vmatprep.subr.mxu0 0.0
    %1203 = vmatpush1.msra.mxu0 0.0
    %1204 = vmatprep.subr.mxu0 0.0
    %1205 = vmatpush1.msra.mxu0 0.0
    %1206 = vmatprep.subr.mxu0 0.0
    %1207 = vmatpush1.msra.mxu0 0.0
    %1208 = vmatprep.subr.mxu0 0.0
    %1209 = vmatpush1.msra.mxu0 0.0
    %1210 = vmatprep.mubr.f32.mxu0 0.0
    %1211 = vmatmul.mubr.f32.gmra.mrb[0].mxu0 %v185
    %v1212 = vpop.f32.mrb[0].mxu0
    %v1213 = vadd.f32 0.0, %v1212
    %v1214 = vpop.f32.mrb[0].mxu0
    %1215 = vdwg.mxu0
    %v1216 = vadd.f32 %v1145, %v1213
    %v1217 = vxor.u32 %v1216, 2147483648
    %v1218 = vmul.f32 %v1217, 1.442695
    %v1219 = vpow.pop %v1218
    %v1220 = vadd.f32 %v1219, 1.0
    %v1221 = vrcp.pop %v1220
    %v1222 = vmul.f32 1.0, %v1221
    %v1223 = vtanh.pop %v1216
    %v1224 = vsel %vm266, %v1223, %v1222
    %v1225 = vmul.f32 %v1224, 0.0
    %1227 = vrot.lane.b32.xlu0 %v1224, 64
    %v1228 = vpop.permute.xlu0 %1227
    %v1230 = vmul.f32 %v1224, %v1228
    %1232 = vrot.lane.b32.xlu0 %v1230, 32
    %v1233 = vpop.permute.xlu0 %1232
    %v1235 = vadd.f32 %v1225, %v1233
    %v1236 = vtanh.pop %v1235
    %1238 = vrot.lane.b32.xlu0 %v1236, 64
    %v1239 = vpop.permute.xlu0 %1238
    %v1241 = vmul.f32 %v1224, %v1239
    %v1242 = vld [vmem:[#allocation2 + $0x4] sm:$0xf]
    %1244 = vrot.lane.b32.xlu0 %v1241, 32
    %v1245 = vpop.permute.xlu0 %1244
    %v1246 = vsel %vm183, %v1245, 0
    %1248 = vmatprep.subr.mxu0 0.0
    %1249 = vmatpush1.msra.mxu0 %v1141
    %1250 = vmatprep.subr.mxu0 0.0
    %1251 = vmatpush1.msra.mxu0 %v1142
    %1252 = vmatprep.subr.mxu0 0.0
    %1253 = vmatpush1.msra.mxu0 %v1143
    %1254 = vmatprep.subr.mxu0 0.0
    %1255 = vmatpush1.msra.mxu0 %v1144
    %1256 = vmatprep.subr.mxu0 0.0
    %1257 = vmatpush1.msra.mxu0 0.0
    %1258 = vmatprep.subr.mxu0 0.0
    %1259 = vmatpush1.msra.mxu0 0.0
    %1260 = vmatprep.subr.mxu0 0.0
    %1261 = vmatpush1.msra.mxu0 0.0
    %1262 = vmatprep.subr.mxu0 0.0
    %1263 = vmatpush1.msra.mxu0 0.0
    %1264 = vmatprep.subr.mxu0 0.0
    %1265 = vmatpush1.msra.mxu0 0.0
    %1266 = vmatprep.subr.mxu0 0.0
    %1267 = vmatpush1.msra.mxu0 0.0
    %1268 = vmatprep.subr.mxu0 0.0
    %1269 = vmatpush1.msra.mxu0 0.0
    %1270 = vmatprep.subr.mxu0 0.0
    %1271 = vmatpush1.msra.mxu0 0.0
    %1272 = vmatprep.subr.mxu0 0.0
    %1273 = vmatpush1.msra.mxu0 0.0
    %1274 = vmatprep.subr.mxu0 0.0
    %1275 = vmatpush1.msra.mxu0 0.0
    %1276 = vmatprep.subr.mxu0 0.0
    %1277 = vmatpush1.msra.mxu0 0.0
    %1278 = vmatprep.subr.mxu0 0.0
    %1279 = vmatpush1.msra.mxu0 0.0
    %1280 = vmatprep.subr.mxu0 0.0
    %1281 = vmatpush1.msra.mxu0 0.0
    %1282 = vmatprep.subr.mxu0 0.0
    %1283 = vmatpush1.msra.mxu0 0.0
    %1284 = vmatprep.subr.mxu0 0.0
    %1285 = vmatpush1.msra.mxu0 0.0
    %1286 = vmatprep.subr.mxu0 0.0
    %1287 = vmatpush1.msra.mxu0 0.0
    %1288 = vmatprep.subr.mxu0 0.0
    %1289 = vmatpush1.msra.mxu0 0.0
    %1290 = vmatprep.subr.mxu0 0.0
    %1291 = vmatpush1.msra.mxu0 0.0
    %1292 = vmatprep.subr.mxu0 0.0
    %1293 = vmatpush1.msra.mxu0 0.0
    %1294 = vmatprep.subr.mxu0 0.0
    %1295 = vmatpush1.msra.mxu0 0.0
    %1296 = vmatprep.subr.mxu0 0.0
    %1297 = vmatpush1.msra.mxu0 0.0
    %1298 = vmatprep.subr.mxu0 0.0
    %1299 = vmatpush1.msra.mxu0 0.0
    %1300 = vmatprep.subr.mxu0 0.0
    %1301 = vmatpush1.msra.mxu0 0.0
    %1302 = vmatprep.subr.mxu0 0.0
    %1303 = vmatpush1.msra.mxu0 0.0
    %1304 = vmatprep.subr.mxu0 0.0
    %1305 = vmatpush1.msra.mxu0 0.0
    %1306 = vmatprep.subr.mxu0 0.0
    %1307 = vmatpush1.msra.mxu0 0.0
    %1308 = vmatprep.subr.mxu0 0.0
    %1309 = vmatpush1.msra.mxu0 0.0
    %1310 = vmatprep.subr.mxu0 0.0
    %1311 = vmatpush1.msra.mxu0 0.0
    %1312 = vmatprep.mubr.f32.mxu0 0.0
    %1313 = vmatmul.mubr.f32.gmra.mrb[0].mxu0 %v1246
    %v1314 = vpop.f32.mrb[0].mxu0
    %v1315 = vadd.f32 0.0, %v1314
    %v1316 = vpop.f32.mrb[0].mxu0
    %1317 = vdwg.mxu0
    %v1318 = vadd.f32 %v1242, %v1315
    %v1319 = vxor.u32 %v1318, 2147483648
    %v1320 = vmul.f32 %v1319, 1.442695
    %v1321 = vpow.pop %v1320
    %v1322 = vadd.f32 %v1321, 1.0
    %v1323 = vrcp.pop %v1322
    %v1324 = vmul.f32 1.0, %v1323
    %v1325 = vtanh.pop %v1318
    %v1326 = vsel %vm266, %v1325, %v1324
    %v1327 = vmul.f32 %v1326, %v1235
    %1329 = vrot.lane.b32.xlu0 %v1326, 64
    %v1330 = vpop.permute.xlu0 %1329
    %v1332 = vmul.f32 %v1326, %v1330
    %1334 = vrot.lane.b32.xlu0 %v1332, 32
    %v1335 = vpop.permute.xlu0 %1334
    %v1337 = vadd.f32 %v1327, %v1335
    %v1338 = vtanh.pop %v1337
    %1340 = vrot.lane.b32.xlu0 %v1338, 64
    %v1341 = vpop.permute.xlu0 %1340
    %v1343 = vmul.f32 %v1326, %v1341
    %v1344 = vld [vmem:[#allocation2 + $0x8] sm:$0xf]
    %1346 = vrot.lane.b32.xlu0 %v1343, 32
    %v1347 = vpop.permute.xlu0 %1346
    %v1348 = vsel %vm183, %v1347, 0
    %1350 = vmatprep.subr.mxu0 0.0
    %1351 = vmatpush1.msra.mxu0 %v1141
    %1352 = vmatprep.subr.mxu0 0.0
    %1353 = vmatpush1.msra.mxu0 %v1142
    %1354 = vmatprep.subr.mxu0 0.0
    %1355 = vmatpush1.msra.mxu0 %v1143
    %1356 = vmatprep.subr.mxu0 0.0
    %1357 = vmatpush1.msra.mxu0 %v1144
    %1358 = vmatprep.subr.mxu0 0.0
    %1359 = vmatpush1.msra.mxu0 0.0
    %1360 = vmatprep.subr.mxu0 0.0
    %1361 = vmatpush1.msra.mxu0 0.0
    %1362 = vmatprep.subr.mxu0 0.0
    %1363 = vmatpush1.msra.mxu0 0.0
    %1364 = vmatprep.subr.mxu0 0.0
    %1365 = vmatpush1.msra.mxu0 0.0
    %1366 = vmatprep.subr.mxu0 0.0
    %1367 = vmatpush1.msra.mxu0 0.0
    %1368 = vmatprep.subr.mxu0 0.0
    %1369 = vmatpush1.msra.mxu0 0.0
    %1370 = vmatprep.subr.mxu0 0.0
    %1371 = vmatpush1.msra.mxu0 0.0
    %1372 = vmatprep.subr.mxu0 0.0
    %1373 = vmatpush1.msra.mxu0 0.0
    %1374 = vmatprep.subr.mxu0 0.0
    %1375 = vmatpush1.msra.mxu0 0.0
    %1376 = vmatprep.subr.mxu0 0.0
    %1377 = vmatpush1.msra.mxu0 0.0
    %1378 = vmatprep.subr.mxu0 0.0
    %1379 = vmatpush1.msra.mxu0 0.0
    %1380 = vmatprep.subr.mxu0 0.0
    %1381 = vmatpush1.msra.mxu0 0.0
    %1382 = vmatprep.subr.mxu0 0.0
    %1383 = vmatpush1.msra.mxu0 0.0
    %1384 = vmatprep.subr.mxu0 0.0
    %1385 = vmatpush1.msra.mxu0 0.0
    %1386 = vmatprep.subr.mxu0 0.0
    %1387 = vmatpush1.msra.mxu0 0.0
    %1388 = vmatprep.subr.mxu0 0.0
    %1389 = vmatpush1.msra.mxu0 0.0
    %1390 = vmatprep.subr.mxu0 0.0
    %1391 = vmatpush1.msra.mxu0 0.0
    %1392 = vmatprep.subr.mxu0 0.0
    %1393 = vmatpush1.msra.mxu0 0.0
    %1394 = vmatprep.subr.mxu0 0.0
    %1395 = vmatpush1.msra.mxu0 0.0
    %1396 = vmatprep.subr.mxu0 0.0
    %1397 = vmatpush1.msra.mxu0 0.0
    %1398 = vmatprep.subr.mxu0 0.0
    %1399 = vmatpush1.msra.mxu0 0.0
    %1400 = vmatprep.subr.mxu0 0.0
    %1401 = vmatpush1.msra.mxu0 0.0
    %1402 = vmatprep.subr.mxu0 0.0
    %1403 = vmatpush1.msra.mxu0 0.0
    %1404 = vmatprep.subr.mxu0 0.0
    %1405 = vmatpush1.msra.mxu0 0.0
    %1406 = vmatprep.subr.mxu0 0.0
    %1407 = vmatpush1.msra.mxu0 0.0
    %1408 = vmatprep.subr.mxu0 0.0
    %1409 = vmatpush1.msra.mxu0 0.0
    %1410 = vmatprep.subr.mxu0 0.0
    %1411 = vmatpush1.msra.mxu0 0.0
    %1412 = vmatprep.subr.mxu0 0.0
    %1413 = vmatpush1.msra.mxu0 0.0
    %1414 = vmatprep.mubr.f32.mxu0 0.0
    %1415 = vmatmul.mubr.f32.gmra.mrb[0].mxu0 %v1348
    %v1416 = vpop.f32.mrb[0].mxu0
    %v1417 = vadd.f32 0.0, %v1416
    %v1418 = vpop.f32.mrb[0].mxu0
    %1419 = vdwg.mxu0
    %v1420 = vadd.f32 %v1344, %v1417
    %v1421 = vxor.u32 %v1420, 2147483648
    %v1422 = vmul.f32 %v1421, 1.442695
    %v1423 = vpow.pop %v1422
    %v1424 = vadd.f32 %v1423, 1.0
    %v1425 = vrcp.pop %v1424
    %v1426 = vmul.f32 1.0, %v1425
    %v1427 = vtanh.pop %v1420
    %v1428 = vsel %vm266, %v1427, %v1426
    %v1429 = vmul.f32 %v1428, %v1337
    %1431 = vrot.lane.b32.xlu0 %v1428, 64
    %v1432 = vpop.permute.xlu0 %1431
    %v1434 = vmul.f32 %v1428, %v1432
    %1436 = vrot.lane.b32.xlu0 %v1434, 32
    %v1437 = vpop.permute.xlu0 %1436
    %v1439 = vadd.f32 %v1429, %v1437
    %v1440 = vtanh.pop %v1439
    %1442 = vrot.lane.b32.xlu0 %v1440, 64
    %v1443 = vpop.permute.xlu0 %1442
    %v1445 = vmul.f32 %v1428, %v1443
    %v1446 = vld [vmem:[#allocation2 + $0xc] sm:$0xf]
    %1448 = vrot.lane.b32.xlu0 %v1445, 32
    %v1449 = vpop.permute.xlu0 %1448
    %v1450 = vsel %vm183, %v1449, 0
    %1452 = vmatprep.subr.mxu0 0.0
    %1453 = vmatpush1.msra.mxu0 %v1141
    %1454 = vmatprep.subr.mxu0 0.0
    %1455 = vmatpush1.msra.mxu0 %v1142
    %1456 = vmatprep.subr.mxu0 0.0
    %1457 = vmatpush1.msra.mxu0 %v1143
    %1458 = vmatprep.subr.mxu0 0.0
    %1459 = vmatpush1.msra.mxu0 %v1144
    %1460 = vmatprep.subr.mxu0 0.0
    %1461 = vmatpush1.msra.mxu0 0.0
    %1462 = vmatprep.subr.mxu0 0.0
    %1463 = vmatpush1.msra.mxu0 0.0
    %1464 = vmatprep.subr.mxu0 0.0
    %1465 = vmatpush1.msra.mxu0 0.0
    %1466 = vmatprep.subr.mxu0 0.0
    %1467 = vmatpush1.msra.mxu0 0.0
    %1468 = vmatprep.subr.mxu0 0.0
    %1469 = vmatpush1.msra.mxu0 0.0
    %1470 = vmatprep.subr.mxu0 0.0
    %1471 = vmatpush1.msra.mxu0 0.0
    %1472 = vmatprep.subr.mxu0 0.0
    %1473 = vmatpush1.msra.mxu0 0.0
    %1474 = vmatprep.subr.mxu0 0.0
    %1475 = vmatpush1.msra.mxu0 0.0
    %1476 = vmatprep.subr.mxu0 0.0
    %1477 = vmatpush1.msra.mxu0 0.0
    %1478 = vmatprep.subr.mxu0 0.0
    %1479 = vmatpush1.msra.mxu0 0.0
    %1480 = vmatprep.subr.mxu0 0.0
    %1481 = vmatpush1.msra.mxu0 0.0
    %1482 = vmatprep.subr.mxu0 0.0
    %1483 = vmatpush1.msra.mxu0 0.0
    %1484 = vmatprep.subr.mxu0 0.0
    %1485 = vmatpush1.msra.mxu0 0.0
    %1486 = vmatprep.subr.mxu0 0.0
    %1487 = vmatpush1.msra.mxu0 0.0
    %1488 = vmatprep.subr.mxu0 0.0
    %1489 = vmatpush1.msra.mxu0 0.0
    %1490 = vmatprep.subr.mxu0 0.0
    %1491 = vmatpush1.msra.mxu0 0.0
    %1492 = vmatprep.subr.mxu0 0.0
    %1493 = vmatpush1.msra.mxu0 0.0
    %1494 = vmatprep.subr.mxu0 0.0
    %1495 = vmatpush1.msra.mxu0 0.0
    %1496 = vmatprep.subr.mxu0 0.0
    %1497 = vmatpush1.msra.mxu0 0.0
    %1498 = vmatprep.subr.mxu0 0.0
    %1499 = vmatpush1.msra.mxu0 0.0
    %1500 = vmatprep.subr.mxu0 0.0
    %1501 = vmatpush1.msra.mxu0 0.0
    %1502 = vmatprep.subr.mxu0 0.0
    %1503 = vmatpush1.msra.mxu0 0.0
    %1504 = vmatprep.subr.mxu0 0.0
    %1505 = vmatpush1.msra.mxu0 0.0
    %1506 = vmatprep.subr.mxu0 0.0
    %1507 = vmatpush1.msra.mxu0 0.0
    %1508 = vmatprep.subr.mxu0 0.0
    %1509 = vmatpush1.msra.mxu0 0.0
    %1510 = vmatprep.subr.mxu0 0.0
    %1511 = vmatpush1.msra.mxu0 0.0
    %1512 = vmatprep.subr.mxu0 0.0
    %1513 = vmatpush1.msra.mxu0 0.0
    %1514 = vmatprep.subr.mxu0 0.0
    %1515 = vmatpush1.msra.mxu0 0.0
    %1516 = vmatprep.mubr.f32.mxu0 0.0
    %1517 = vmatmul.mubr.f32.gmra.mrb[0].mxu0 %v1450
    %v1518 = vpop.f32.mrb[0].mxu0
    %v1519 = vadd.f32 0.0, %v1518
    %v1520 = vpop.f32.mrb[0].mxu0
    %1521 = vdwg.mxu0
    %v1522 = vadd.f32 %v1446, %v1519
    %v1523 = vxor.u32 %v1522, 2147483648
    %v1524 = vmul.f32 %v1523, 1.442695
    %v1525 = vpow.pop %v1524
    %v1526 = vadd.f32 %v1525, 1.0
    %v1527 = vrcp.pop %v1526
    %v1528 = vmul.f32 1.0, %v1527
    %v1529 = vtanh.pop %v1522
    %v1530 = vsel %vm266, %v1529, %v1528
    %v1531 = vmul.f32 %v1530, %v1439
    %1533 = vrot.lane.b32.xlu0 %v1530, 64
    %v1534 = vpop.permute.xlu0 %1533
    %v1536 = vmul.f32 %v1530, %v1534
    %1538 = vrot.lane.b32.xlu0 %v1536, 32
    %v1539 = vpop.permute.xlu0 %1538
    %v1541 = vadd.f32 %v1531, %v1539
    %v1542 = vtanh.pop %v1541
    %1544 = vrot.lane.b32.xlu0 %v1542, 64
    %v1545 = vpop.permute.xlu0 %1544
    %v1547 = vmul.f32 %v1530, %v1545
    %v1548 = vld [vmem:[#allocation2 + $0x10] sm:$0xf]
    %1550 = vrot.lane.b32.xlu0 %v1547, 32
    %v1551 = vpop.permute.xlu0 %1550
    %v1552 = vsel %vm183, %v1551, 0
    %1554 = vmatprep.subr.mxu0 0.0
    %1555 = vmatpush1.msra.mxu0 %v1141
    %1556 = vmatprep.subr.mxu0 0.0
    %1557 = vmatpush1.msra.mxu0 %v1142
    %1558 = vmatprep.subr.mxu0 0.0
    %1559 = vmatpush1.msra.mxu0 %v1143
    %1560 = vmatprep.subr.mxu0 0.0
    %1561 = vmatpush1.msra.mxu0 %v1144
    %1562 = vmatprep.subr.mxu0 0.0
    %1563 = vmatpush1.msra.mxu0 0.0
    %1564 = vmatprep.subr.mxu0 0.0
    %1565 = vmatpush1.msra.mxu0 0.0
    %1566 = vmatprep.subr.mxu0 0.0
    %1567 = vmatpush1.msra.mxu0 0.0
    %1568 = vmatprep.subr.mxu0 0.0
    %1569 = vmatpush1.msra.mxu0 0.0
    %1570 = vmatprep.subr.mxu0 0.0
    %1571 = vmatpush1.msra.mxu0 0.0
    %1572 = vmatprep.subr.mxu0 0.0
    %1573 = vmatpush1.msra.mxu0 0.0
    %1574 = vmatprep.subr.mxu0 0.0
    %1575 = vmatpush1.msra.mxu0 0.0
    %1576 = vmatprep.subr.mxu0 0.0
    %1577 = vmatpush1.msra.mxu0 0.0
    %1578 = vmatprep.subr.mxu0 0.0
    %1579 = vmatpush1.msra.mxu0 0.0
    %1580 = vmatprep.subr.mxu0 0.0
    %1581 = vmatpush1.msra.mxu0 0.0
    %1582 = vmatprep.subr.mxu0 0.0
    %1583 = vmatpush1.msra.mxu0 0.0
    %1584 = vmatprep.subr.mxu0 0.0
    %1585 = vmatpush1.msra.mxu0 0.0
    %1586 = vmatprep.subr.mxu0 0.0
    %1587 = vmatpush1.msra.mxu0 0.0
    %1588 = vmatprep.subr.mxu0 0.0
    %1589 = vmatpush1.msra.mxu0 0.0
    %1590 = vmatprep.subr.mxu0 0.0
    %1591 = vmatpush1.msra.mxu0 0.0
    %1592 = vmatprep.subr.mxu0 0.0
    %1593 = vmatpush1.msra.mxu0 0.0
    %1594 = vmatprep.subr.mxu0 0.0
    %1595 = vmatpush1.msra.mxu0 0.0
    %1596 = vmatprep.subr.mxu0 0.0
    %1597 = vmatpush1.msra.mxu0 0.0
    %1598 = vmatprep.subr.mxu0 0.0
    %1599 = vmatpush1.msra.mxu0 0.0
    %1600 = vmatprep.subr.mxu0 0.0
    %1601 = vmatpush1.msra.mxu0 0.0
    %1602 = vmatprep.subr.mxu0 0.0
    %1603 = vmatpush1.msra.mxu0 0.0
    %1604 = vmatprep.subr.mxu0 0.0
    %1605 = vmatpush1.msra.mxu0 0.0
    %1606 = vmatprep.subr.mxu0 0.0
    %1607 = vmatpush1.msra.mxu0 0.0
    %1608 = vmatprep.subr.mxu0 0.0
    %1609 = vmatpush1.msra.mxu0 0.0
    %1610 = vmatprep.subr.mxu0 0.0
    %1611 = vmatpush1.msra.mxu0 0.0
    %1612 = vmatprep.subr.mxu0 0.0
    %1613 = vmatpush1.msra.mxu0 0.0
    %1614 = vmatprep.subr.mxu0 0.0
    %1615 = vmatpush1.msra.mxu0 0.0
    %1616 = vmatprep.subr.mxu0 0.0
    %1617 = vmatpush1.msra.mxu0 0.0
    %1618 = vmatprep.mubr.f32.mxu0 0.0
    %1619 = vmatmul.mubr.f32.gmra.mrb[0].mxu0 %v1552
    %v1620 = vpop.f32.mrb[0].mxu0
    %v1621 = vadd.f32 0.0, %v1620
    %v1622 = vpop.f32.mrb[0].mxu0
    %1623 = vdwg.mxu0
    %v1624 = vadd.f32 %v1548, %v1621
    %v1625 = vxor.u32 %v1624, 2147483648
    %v1626 = vmul.f32 %v1625, 1.442695
    %v1627 = vpow.pop %v1626
    %v1628 = vadd.f32 %v1627, 1.0
    %v1629 = vrcp.pop %v1628
    %v1630 = vmul.f32 1.0, %v1629
    %v1631 = vtanh.pop %v1624
    %v1632 = vsel %vm266, %v1631, %v1630
    %v1633 = vmul.f32 %v1632, %v1541
    %1635 = vrot.lane.b32.xlu0 %v1632, 64
    %v1636 = vpop.permute.xlu0 %1635
    %v1638 = vmul.f32 %v1632, %v1636
    %1640 = vrot.lane.b32.xlu0 %v1638, 32
    %v1641 = vpop.permute.xlu0 %1640
    %v1643 = vadd.f32 %v1633, %v1641
    %v1644 = vtanh.pop %v1643
    %1646 = vrot.lane.b32.xlu0 %v1644, 64
    %v1647 = vpop.permute.xlu0 %1646
    %v1649 = vmul.f32 %v1632, %v1647
    %v1650 = vld [vmem:[#allocation2 + $0x14] sm:$0xf]
    %1652 = vrot.lane.b32.xlu0 %v1649, 32
    %v1653 = vpop.permute.xlu0 %1652
    %v1654 = vsel %vm183, %v1653, 0
    %1656 = vmatprep.subr.mxu0 0.0
    %1657 = vmatpush1.msra.mxu0 %v1141
    %1658 = vmatprep.subr.mxu0 0.0
    %1659 = vmatpush1.msra.mxu0 %v1142
    %1660 = vmatprep.subr.mxu0 0.0
    %1661 = vmatpush1.msra.mxu0 %v1143
    %1662 = vmatprep.subr.mxu0 0.0
    %1663 = vmatpush1.msra.mxu0 %v1144
    %1664 = vmatprep.subr.mxu0 0.0
    %1665 = vmatpush1.msra.mxu0 0.0
    %1666 = vmatprep.subr.mxu0 0.0
    %1667 = vmatpush1.msra.mxu0 0.0
    %1668 = vmatprep.subr.mxu0 0.0
    %1669 = vmatpush1.msra.mxu0 0.0
    %1670 = vmatprep.subr.mxu0 0.0
    %1671 = vmatpush1.msra.mxu0 0.0
    %1672 = vmatprep.subr.mxu0 0.0
    %1673 = vmatpush1.msra.mxu0 0.0
    %1674 = vmatprep.subr.mxu0 0.0
    %1675 = vmatpush1.msra.mxu0 0.0
    %1676 = vmatprep.subr.mxu0 0.0
    %1677 = vmatpush1.msra.mxu0 0.0
    %1678 = vmatprep.subr.mxu0 0.0
    %1679 = vmatpush1.msra.mxu0 0.0
    %1680 = vmatprep.subr.mxu0 0.0
    %1681 = vmatpush1.msra.mxu0 0.0
    %1682 = vmatprep.subr.mxu0 0.0
    %1683 = vmatpush1.msra.mxu0 0.0
    %1684 = vmatprep.subr.mxu0 0.0
    %1685 = vmatpush1.msra.mxu0 0.0
    %1686 = vmatprep.subr.mxu0 0.0
    %1687 = vmatpush1.msra.mxu0 0.0
    %1688 = vmatprep.subr.mxu0 0.0
    %1689 = vmatpush1.msra.mxu0 0.0
    %1690 = vmatprep.subr.mxu0 0.0
    %1691 = vmatpush1.msra.mxu0 0.0
    %1692 = vmatprep.subr.mxu0 0.0
    %1693 = vmatpush1.msra.mxu0 0.0
    %1694 = vmatprep.subr.mxu0 0.0
    %1695 = vmatpush1.msra.mxu0 0.0
    %1696 = vmatprep.subr.mxu0 0.0
    %1697 = vmatpush1.msra.mxu0 0.0
    %1698 = vmatprep.subr.mxu0 0.0
    %1699 = vmatpush1.msra.mxu0 0.0
    %1700 = vmatprep.subr.mxu0 0.0
    %1701 = vmatpush1.msra.mxu0 0.0
    %1702 = vmatprep.subr.mxu0 0.0
    %1703 = vmatpush1.msra.mxu0 0.0
    %1704 = vmatprep.subr.mxu0 0.0
    %1705 = vmatpush1.msra.mxu0 0.0
    %1706 = vmatprep.subr.mxu0 0.0
    %1707 = vmatpush1.msra.mxu0 0.0
    %1708 = vmatprep.subr.mxu0 0.0
    %1709 = vmatpush1.msra.mxu0 0.0
    %1710 = vmatprep.subr.mxu0 0.0
    %1711 = vmatpush1.msra.mxu0 0.0
    %1712 = vmatprep.subr.mxu0 0.0
    %1713 = vmatpush1.msra.mxu0 0.0
    %1714 = vmatprep.subr.mxu0 0.0
    %1715 = vmatpush1.msra.mxu0 0.0
    %1716 = vmatprep.subr.mxu0 0.0
    %1717 = vmatpush1.msra.mxu0 0.0
    %1718 = vmatprep.subr.mxu0 0.0
    %1719 = vmatpush1.msra.mxu0 0.0
    %1720 = vmatprep.mubr.f32.mxu0 0.0
    %1721 = vmatmul.mubr.f32.gmra.mrb[0].mxu0 %v1654
    %v1722 = vpop.f32.mrb[0].mxu0
    %v1723 = vadd.f32 0.0, %v1722
    %v1724 = vpop.f32.mrb[0].mxu0
    %1725 = vdwg.mxu0
    %v1726 = vadd.f32 %v1650, %v1723
    %v1727 = vxor.u32 %v1726, 2147483648
    %v1728 = vmul.f32 %v1727, 1.442695
    %v1729 = vpow.pop %v1728
    %v1730 = vadd.f32 %v1729, 1.0
    %v1731 = vrcp.pop %v1730
    %v1732 = vmul.f32 1.0, %v1731
    %v1733 = vtanh.pop %v1726
    %v1734 = vsel %vm266, %v1733, %v1732
    %v1735 = vmul.f32 %v1734, %v1643
    %1737 = vrot.lane.b32.xlu0 %v1734, 64
    %v1738 = vpop.permute.xlu0 %1737
    %v1740 = vmul.f32 %v1734, %v1738
    %1742 = vrot.lane.b32.xlu0 %v1740, 32
    %v1743 = vpop.permute.xlu0 %1742
    %v1745 = vadd.f32 %v1735, %v1743
    %v1746 = vtanh.pop %v1745
    %1748 = vrot.lane.b32.xlu0 %v1746, 64
    %v1749 = vpop.permute.xlu0 %1748
    %v1751 = vmul.f32 %v1734, %v1749
    %v1752 = vld [vmem:[#allocation2 + $0x18] sm:$0xf]
    %1754 = vrot.lane.b32.xlu0 %v1751, 32
    %v1755 = vpop.permute.xlu0 %1754
    %v1756 = vsel %vm183, %v1755, 0
    %1758 = vmatprep.subr.mxu0 0.0
    %1759 = vmatpush1.msra.mxu0 %v1141
    %1760 = vmatprep.subr.mxu0 0.0
    %1761 = vmatpush1.msra.mxu0 %v1142
    %1762 = vmatprep.subr.mxu0 0.0
    %1763 = vmatpush1.msra.mxu0 %v1143
    %1764 = vmatprep.subr.mxu0 0.0
    %1765 = vmatpush1.msra.mxu0 %v1144
    %1766 = vmatprep.subr.mxu0 0.0
    %1767 = vmatpush1.msra.mxu0 0.0
    %1768 = vmatprep.subr.mxu0 0.0
    %1769 = vmatpush1.msra.mxu0 0.0
    %1770 = vmatprep.subr.mxu0 0.0
    %1771 = vmatpush1.msra.mxu0 0.0
    %1772 = vmatprep.subr.mxu0 0.0
    %1773 = vmatpush1.msra.mxu0 0.0
    %1774 = vmatprep.subr.mxu0 0.0
    %1775 = vmatpush1.msra.mxu0 0.0
    %1776 = vmatprep.subr.mxu0 0.0
    %1777 = vmatpush1.msra.mxu0 0.0
    %1778 = vmatprep.subr.mxu0 0.0
    %1779 = vmatpush1.msra.mxu0 0.0
    %1780 = vmatprep.subr.mxu0 0.0
    %1781 = vmatpush1.msra.mxu0 0.0
    %1782 = vmatprep.subr.mxu0 0.0
    %1783 = vmatpush1.msra.mxu0 0.0
    %1784 = vmatprep.subr.mxu0 0.0
    %1785 = vmatpush1.msra.mxu0 0.0
    %1786 = vmatprep.subr.mxu0 0.0
    %1787 = vmatpush1.msra.mxu0 0.0
    %1788 = vmatprep.subr.mxu0 0.0
    %1789 = vmatpush1.msra.mxu0 0.0
    %1790 = vmatprep.subr.mxu0 0.0
    %1791 = vmatpush1.msra.mxu0 0.0
    %1792 = vmatprep.subr.mxu0 0.0
    %1793 = vmatpush1.msra.mxu0 0.0
    %1794 = vmatprep.subr.mxu0 0.0
    %1795 = vmatpush1.msra.mxu0 0.0
    %1796 = vmatprep.subr.mxu0 0.0
    %1797 = vmatpush1.msra.mxu0 0.0
    %1798 = vmatprep.subr.mxu0 0.0
    %1799 = vmatpush1.msra.mxu0 0.0
    %1800 = vmatprep.subr.mxu0 0.0
    %1801 = vmatpush1.msra.mxu0 0.0
    %1802 = vmatprep.subr.mxu0 0.0
    %1803 = vmatpush1.msra.mxu0 0.0
    %1804 = vmatprep.subr.mxu0 0.0
    %1805 = vmatpush1.msra.mxu0 0.0
    %1806 = vmatprep.subr.mxu0 0.0
    %1807 = vmatpush1.msra.mxu0 0.0
    %1808 = vmatprep.subr.mxu0 0.0
    %1809 = vmatpush1.msra.mxu0 0.0
    %1810 = vmatprep.subr.mxu0 0.0
    %1811 = vmatpush1.msra.mxu0 0.0
    %1812 = vmatprep.subr.mxu0 0.0
    %1813 = vmatpush1.msra.mxu0 0.0
    %1814 = vmatprep.subr.mxu0 0.0
    %1815 = vmatpush1.msra.mxu0 0.0
    %1816 = vmatprep.subr.mxu0 0.0
    %1817 = vmatpush1.msra.mxu0 0.0
    %1818 = vmatprep.subr.mxu0 0.0
    %1819 = vmatpush1.msra.mxu0 0.0
    %1820 = vmatprep.subr.mxu0 0.0
    %1821 = vmatpush1.msra.mxu0 0.0
    %1822 = vmatprep.mubr.f32.mxu0 0.0
    %1823 = vmatmul.mubr.f32.gmra.mrb[0].mxu0 %v1756
    %v1824 = vpop.f32.mrb[0].mxu0
    %v1825 = vadd.f32 0.0, %v1824
    %v1826 = vpop.f32.mrb[0].mxu0
    %1827 = vdwg.mxu0
    %v1828 = vadd.f32 %v1752, %v1825
    %v1829 = vxor.u32 %v1828, 2147483648
    %v1830 = vmul.f32 %v1829, 1.442695
    %v1831 = vpow.pop %v1830
    %v1832 = vadd.f32 %v1831, 1.0
    %v1833 = vrcp.pop %v1832
    %v1834 = vmul.f32 1.0, %v1833
    %v1835 = vtanh.pop %v1828
    %v1836 = vsel %vm266, %v1835, %v1834
    %v1837 = vmul.f32 %v1836, %v1745
    %1839 = vrot.lane.b32.xlu0 %v1836, 64
    %v1840 = vpop.permute.xlu0 %1839
    %v1842 = vmul.f32 %v1836, %v1840
    %1844 = vrot.lane.b32.xlu0 %v1842, 32
    %v1845 = vpop.permute.xlu0 %1844
    %v1847 = vadd.f32 %v1837, %v1845
    %v1848 = vtanh.pop %v1847
    %1850 = vrot.lane.b32.xlu0 %v1848, 64
    %v1851 = vpop.permute.xlu0 %1850
    %v1853 = vmul.f32 %v1836, %v1851
    %v1854 = vld [vmem:[#allocation2 + $0x1c] sm:$0xf]
    %1856 = vrot.lane.b32.xlu0 %v1853, 32
    %v1857 = vpop.permute.xlu0 %1856
    %v1858 = vsel %vm183, %v1857, 0
    %1860 = vmatprep.subr.mxu0 0.0
    %1861 = vmatpush1.msra.mxu0 %v1141
    %1862 = vmatprep.subr.mxu0 0.0
    %1863 = vmatpush1.msra.mxu0 %v1142
    %1864 = vmatprep.subr.mxu0 0.0
    %1865 = vmatpush1.msra.mxu0 %v1143
    %1866 = vmatprep.subr.mxu0 0.0
    %1867 = vmatpush1.msra.mxu0 %v1144
    %1868 = vmatprep.subr.mxu0 0.0
    %1869 = vmatpush1.msra.mxu0 0.0
    %1870 = vmatprep.subr.mxu0 0.0
    %1871 = vmatpush1.msra.mxu0 0.0
    %1872 = vmatprep.subr.mxu0 0.0
    %1873 = vmatpush1.msra.mxu0 0.0
    %1874 = vmatprep.subr.mxu0 0.0
    %1875 = vmatpush1.msra.mxu0 0.0
    %1876 = vmatprep.subr.mxu0 0.0
    %1877 = vmatpush1.msra.mxu0 0.0
    %1878 = vmatprep.subr.mxu0 0.0
    %1879 = vmatpush1.msra.mxu0 0.0
    %1880 = vmatprep.subr.mxu0 0.0
    %1881 = vmatpush1.msra.mxu0 0.0
    %1882 = vmatprep.subr.mxu0 0.0
    %1883 = vmatpush1.msra.mxu0 0.0
    %1884 = vmatprep.subr.mxu0 0.0
    %1885 = vmatpush1.msra.mxu0 0.0
    %1886 = vmatprep.subr.mxu0 0.0
    %1887 = vmatpush1.msra.mxu0 0.0
    %1888 = vmatprep.subr.mxu0 0.0
    %1889 = vmatpush1.msra.mxu0 0.0
    %1890 = vmatprep.subr.mxu0 0.0
    %1891 = vmatpush1.msra.mxu0 0.0
    %1892 = vmatprep.subr.mxu0 0.0
    %1893 = vmatpush1.msra.mxu0 0.0
    %1894 = vmatprep.subr.mxu0 0.0
    %1895 = vmatpush1.msra.mxu0 0.0
    %1896 = vmatprep.subr.mxu0 0.0
    %1897 = vmatpush1.msra.mxu0 0.0
    %1898 = vmatprep.subr.mxu0 0.0
    %1899 = vmatpush1.msra.mxu0 0.0
    %1900 = vmatprep.subr.mxu0 0.0
    %1901 = vmatpush1.msra.mxu0 0.0
    %1902 = vmatprep.subr.mxu0 0.0
    %1903 = vmatpush1.msra.mxu0 0.0
    %1904 = vmatprep.subr.mxu0 0.0
    %1905 = vmatpush1.msra.mxu0 0.0
    %1906 = vmatprep.subr.mxu0 0.0
    %1907 = vmatpush1.msra.mxu0 0.0
    %1908 = vmatprep.subr.mxu0 0.0
    %1909 = vmatpush1.msra.mxu0 0.0
    %1910 = vmatprep.subr.mxu0 0.0
    %1911 = vmatpush1.msra.mxu0 0.0
    %1912 = vmatprep.subr.mxu0 0.0
    %1913 = vmatpush1.msra.mxu0 0.0
    %1914 = vmatprep.subr.mxu0 0.0
    %1915 = vmatpush1.msra.mxu0 0.0
    %1916 = vmatprep.subr.mxu0 0.0
    %1917 = vmatpush1.msra.mxu0 0.0
    %1918 = vmatprep.subr.mxu0 0.0
    %1919 = vmatpush1.msra.mxu0 0.0
    %1920 = vmatprep.subr.mxu0 0.0
    %1921 = vmatpush1.msra.mxu0 0.0
    %1922 = vmatprep.subr.mxu0 0.0
    %1923 = vmatpush1.msra.mxu0 0.0
    %1924 = vmatprep.mubr.f32.mxu0 0.0
    %1925 = vmatmul.mubr.f32.gmra.mrb[0].mxu0 %v1858
    %v1926 = vpop.f32.mrb[0].mxu0
    %v1927 = vadd.f32 0.0, %v1926
    %v1928 = vpop.f32.mrb[0].mxu0
    %1929 = vdwg.mxu0
    %v1930 = vadd.f32 %v1854, %v1927
    %v1931 = vxor.u32 %v1930, 2147483648
    %v1932 = vmul.f32 %v1931, 1.442695
    %v1933 = vpow.pop %v1932
    %v1934 = vadd.f32 %v1933, 1.0
    %v1935 = vrcp.pop %v1934
    %v1936 = vmul.f32 1.0, %v1935
    %v1937 = vtanh.pop %v1930
    %v1938 = vsel %vm266, %v1937, %v1936
    %v1939 = vmul.f32 %v1938, %v1847
    %1941 = vrot.lane.b32.xlu0 %v1938, 64
    %v1942 = vpop.permute.xlu0 %1941
    %v1944 = vmul.f32 %v1938, %v1942
    %1946 = vrot.lane.b32.xlu0 %v1944, 32
    %v1947 = vpop.permute.xlu0 %1946
    %v1949 = vadd.f32 %v1939, %v1947
    %v1950 = vtanh.pop %v1949
    %1952 = vrot.lane.b32.xlu0 %v1950, 64
    %v1953 = vpop.permute.xlu0 %1952
    %v1955 = vmul.f32 %v1938, %v1953
    %1957 = vrot.lane.b32.xlu0 %v1955, 32
    %v1958 = vpop.permute.xlu0 %1957
    %s1960 = scalar_lea.vmem [#allocation9], 4
    %1961 = vst.msk [vmem:[%s1960] sm:$0xf] %vm289, %v1958
    %1963 = vrot.lane.b32.xlu0 %v1949, 96
    %v1964 = vpop.permute.xlu0 %1963
    %s1966 = scalar_lea.vmem [#allocation10], 4
    %1967 = vst.msk [vmem:[%s1966] sm:$0xf] %vm289, %v1964
    // Predicated region
    $region38: #{encoder_forward.1} parent=1 // pred_check
      _
    $region39: #{encoder_forward.1} parent=1 // pred_check_branch
      %1969 = sbr.rel (0) target = $region41
    $region40: #{encoder_forward.1} parent=1 // pred_region
      %s1971 = ssub.s32 128, 128
      %1972 = vsyncadd [#allocation6], %s1971
      %s1973 = sshll.u32 [#allocation9], 4
      %s1974 = int_to_ptr.vmem [resolvable:$true] %s1973
      %1979 = dma.vmem_to_hbm [thread:$0]  %s1974, 128, %s7, [#allocation6], 64, 64, 4
    $region41: #{encoder_forward.1} parent=1 // pred_fallthru
      _
    // Predicated region
    $region42: #{encoder_forward.1} parent=1 // pred_check
      _
    $region43: #{encoder_forward.1} parent=1 // pred_check_branch
      %1981 = sbr.rel (0) target = $region45
    $region44: #{encoder_forward.1} parent=1 // pred_region
      %s1983 = ssub.s32 128, 128
      %1984 = vsyncadd [#allocation11], %s1983
      %s1985 = sshll.u32 [#allocation10], 4
      %s1986 = int_to_ptr.vmem [resolvable:$true] %s1985
      %1991 = dma.vmem_to_hbm [thread:$0]  %s1986, 128, %s8, [#allocation11], 64, 64, 4
    $region45: #{encoder_forward.1} parent=1 // pred_fallthru
      _
    // Predicated region
    $region46: #{encoder_forward.1} parent=1 // pred_check
      _
    $region47: #{encoder_forward.1} parent=1 // pred_check_branch
      %1993 = sbr.rel (0) target = $region49
    $region48: #{encoder_forward.1} parent=1 // pred_region
      %1994 = dma.done [#allocation6], 128
    $region49: #{encoder_forward.1} parent=1 // pred_fallthru
      _
    // Predicated region
    $region50: #{encoder_forward.1} parent=1 // pred_check
      _
    $region51: #{encoder_forward.1} parent=1 // pred_check_branch
      %1996 = sbr.rel (0) target = $region53
    $region52: #{encoder_forward.1} parent=1 // pred_region
      %1997 = dma.done [#allocation11], 128
    $region53: #{encoder_forward.1} parent=1 // pred_fallthru
      _
    %1998 = vsyncpa [#allocation5], 1
    %1999 = vsyncpa [#allocation8], 1
    %2000 = vsyncpa [#allocation6], 1
    %2001 = vsyncpa [#allocation11], 1

</llo_original>
